<compile_context>
chip_gen: v7x
topology: tpu7x:2x2x1
jax: 0.10.0
libtpu: 0.0.40
codegen_flags: <defaults>
</compile_context>

<pallas_src>
import math

import jax
import jax.numpy as jnp
from jax.experimental import pallas as pl
from jax.experimental.pallas import tpu as pltpu


def _make_block_kernel(H, W, C, do_binarize, num_convs, compute_dtype,
                       use_im2col):
    Wp = W + 2                      # padded row width
    HWp = H * Wp                    # conv outputs live on the (H, Wp) grid
    PAD = (H + 2) * Wp + 2          # flat padded image length (+2: tap (2,2))
    OFF = Wp + 1                    # flat offset of interior pixel (0, 0)
    HEAD = OFF                      # [0, OFF): not covered by interior store
    TAIL = PAD - OFF - HWp          # [OFF+HWp, PAD): not covered either

    def conv_bn(pad_ref, cols_ref, w_ref, s_ref, b_ref):
        """bn(conv3x3(padded image)) on the (H, Wp) grid."""
        if use_im2col:
            # One im2col MXU matmul: out (C,HWp) = W (C,9C) @ cols (9C,HWp).
            for k in range(9):                       # 9 lane-shifted taps
                kh, kw = divmod(k, 3)
                d = kh * Wp + kw
                cols_ref[k * C:(k + 1) * C, :] = (
                    pad_ref[:, d:d + HWp].astype(compute_dtype))
            acc = jnp.dot(w_ref[...], cols_ref[...],
                          preferred_element_type=jnp.float32)
        else:
            # Large C: K=C per tap already fills the MXU; skip the tap copy.
            acc = jnp.zeros((C, HWp), jnp.float32)
            for k in range(9):
                kh, kw = divmod(k, 3)
                d = kh * Wp + kw
                acc = acc + jnp.dot(w_ref[:, k * C:(k + 1) * C],
                                    pad_ref[:, d:d + HWp].astype(compute_dtype),
                                    preferred_element_type=jnp.float32)
        return acc * s_ref[...] + b_ref[...]                 # folded BatchNorm

    def zero_halo(pad_ref):
        # Only the tiny border the dense interior store does not reach.
        pad_ref[:, 0:HEAD] = jnp.zeros((C, HEAD), jnp.float32)
        pad_ref[:, OFF + HWp:PAD] = jnp.zeros((C, TAIL), jnp.float32)

    def kernel(*refs):
        it = iter(refs)
        x_ref = next(it)
        w1_ref = next(it)
        w2_ref = next(it) if num_convs == 2 else None
        s1_ref = next(it)
        b1_ref = next(it)
        f_ref = s2_ref = b2_ref = None
        if num_convs == 2:
            s2_ref = next(it)
            b2_ref = next(it)
            if do_binarize:
                f_ref = next(it)
        o_ref = next(it)
        xpad_ref = next(it)
        mpad_ref = next(it) if num_convs == 2 else None
        cols_ref = next(it) if use_im2col else None

        zero_halo(xpad_ref)
        if mpad_ref is not None:
            zero_halo(mpad_ref)

        # ---- conv1 halo image: x arrives pre-padded on the (H, Wp) grid, so
        # the interior (including its zero pad columns) is ONE dense store.
        x = x_ref[0]                                          # (C, HWp) f32
        if do_binarize:
            xpad_ref[:, OFF:OFF + HWp] = x
        else:
            xpad_ref[:, OFF:OFF + HWp] = jnp.maximum(x, 0.0)  # input ReLU once

        y1 = conv_bn(xpad_ref, cols_ref, w1_ref, s1_ref, b1_ref)
        if not do_binarize:
            y1 = jnp.maximum(y1, 0.0)                         # relu(bn1(conv1))

        if num_convs == 1:
            # cut_network path: dense store; wrapper slices off pad columns.
            o_ref[0] = y1.astype(o_ref.dtype)
            return

        # ---- conv2: out1 never leaves VMEM.  Wrap-around columns (ow >= W)
        # of the (H, Wp) grid land exactly on conv2-input pad positions, so
        # mask them to zero, then ONE dense interior store.
        lane = jax.lax.broadcasted_iota(jnp.int32, (1, HWp), 1)
        valid = (lane % Wp) < W
        mpad_ref[:, OFF:OFF + HWp] = jnp.where(valid, y1, 0.0)

        y2 = conv_bn(mpad_ref, cols_ref, w2_ref, s2_ref, b2_ref)

        # ---- residual add + ONE dense output store --------------------------
        if do_binarize:
            res = jnp.abs(x_ref[0]) * f_ref[...]              # abs(x)*factor
        else:
            res = xpad_ref[:, OFF:OFF + HWp]                  # relu(x), staged
        o_ref[0] = (y2 + res).astype(o_ref.dtype)

    return kernel


def _block_call(x_flat, H, W, weights, bn_affine, factor, *, do_binarize,
                num_convs, compute_dtype):
    N, C, HWp = x_flat.shape
    Wp = W + 2
    assert HWp == H * Wp
    PAD = (H + 2) * Wp + 2
    use_im2col = C < 128
    kernel = _make_block_kernel(H, W, C, do_binarize, num_convs,
                                compute_dtype, use_im2col)

    full2 = lambda n: (0, 0)
    per_n = lambda n: (n, 0, 0)

    itemsize_c = jnp.dtype(compute_dtype).itemsize

    in_specs = [pl.BlockSpec((1, C, HWp), per_n)]
    args = [x_flat]
    for w in weights:                                   # (C, 9*C) each
        in_specs.append(pl.BlockSpec((C, 9 * C), full2))
        args.append(w.astype(compute_dtype))            # MXU operand dtype
    for p in bn_affine:                                 # (C, 1) each, f32
        in_specs.append(pl.BlockSpec((C, 1), full2))
        args.append(p)
    if do_binarize and num_convs == 2:
        in_specs.append(pl.BlockSpec((1, 1), full2))
        args.append(factor)

    scratch = [pltpu.VMEM((C, PAD), jnp.float32)]               # conv1 halo
    if num_convs == 2:
        scratch.append(pltpu.VMEM((C, PAD), jnp.float32))       # out1 halo
    if use_im2col:
        scratch.append(pltpu.VMEM((9 * C, HWp), compute_dtype))  # im2col cols

    # Explicit VMEM budget: double-buffered I/O blocks + params + scratch +
    # headroom for live f32 temporaries (y1/y2/residual).
    n_pads = 1 + (1 if num_convs == 2 else 0)
    vmem_needed = (
        2 * 2 * C * HWp * 4                                       # x + out, 2x buf
        + 2 * sum(int(w.size) for w in weights) * itemsize_c
        + 2 * sum(int(p.size) for p in bn_affine) * 4 + 2 * 4
        + n_pads * C * PAD * 4
        + (9 * C * HWp * itemsize_c if use_im2col else 0)
        + 8 * C * HWp * 4)
    # Cap below 96 MiB; on v7x (64 MiB physical) large shapes additionally
    # need the H-tile split (see TODO at top of file).
    vmem_limit = int(min(max(vmem_needed * 1.5 + (2 << 20), 32 << 20), 96 << 20))

    flops = 2 * N * H * W * 9 * C * C * num_convs
    bytes_accessed = (4 * 2 * N * C * HWp
                      + itemsize_c * sum(int(w.size) for w in weights)
                      + 4 * sum(int(p.size) for p in bn_affine))

    return pl.pallas_call(
        kernel,
        out_shape=jax.ShapeDtypeStruct((N, C, HWp), jnp.float32),
        grid=(N,),
        in_specs=in_specs,
        out_specs=pl.BlockSpec((1, C, HWp), per_n),
        scratch_shapes=scratch,
        compiler_params=pltpu.CompilerParams(
            dimension_semantics=("parallel",),
            vmem_limit_bytes=vmem_limit),
        cost_estimate=pl.CostEstimate(flops=flops, transcendentals=0,
                                      bytes_accessed=bytes_accessed),
    )(*args)


def _fold_bn(gamma, beta, mean, var, eps=1e-5):
    scale = gamma / jnp.sqrt(var + eps)
    return scale, beta - mean * scale


def basic_block_abs(inp, params, do_binarize=False,
                    compute_dtype=jnp.float32, eps=1e-5):
    """Mirrors BasicBlockAbs.forward for stride=1, in_planes == planes
    (identity shortcut).  The list-carry bookkeeping (i_layer, cut_network,
    feature extraction) is Python-side control flow handled here.
    Set compute_dtype=jnp.bfloat16 to feed the MXU bf16 operands on any
    generation (v5e included); accumulation and BN/ReLU/residual stay f32."""
    x_nchw, i_layer, feat_layers, features, cut_network = inp
    if cut_network and i_layer > cut_network:
        return inp

    N, C, H, W = x_nchw.shape
    Wp = W + 2
    x = x_nchw.astype(jnp.float32)
    # Lane-dense I/O: pre-pad the two halo columns and flatten the spatial
    # grid so every kernel load/store is a dense (C, H*Wp) slab.
    xp = jnp.pad(x, ((0, 0), (0, 0), (0, 0), (0, 2))).reshape(N, C, H * Wp)

    # (Cout, 9*Cin) weight layout: column index = (kh*3 + kw)*Cin + ci.
    w1 = jnp.transpose(params["w1_oihw"], (0, 2, 3, 1)).reshape(C, 9 * C)
    w2 = jnp.transpose(params["w2_oihw"], (0, 2, 3, 1)).reshape(C, 9 * C)
    s1, b1 = _fold_bn(params["g1"], params["b1"], params["m1"], params["v1"], eps)
    s2, b2 = _fold_bn(params["g2"], params["b2"], params["m2"], params["v2"], eps)
    s1, b1, s2, b2 = (a.reshape(C, 1).astype(jnp.float32)
                      for a in (s1, b1, s2, b2))
    factor = jnp.asarray(params["move_average_factor"],
                         jnp.float32).reshape(1, 1)

    def unflatten(o_flat):           # drop pad columns (cheap XLA slice)
        return o_flat.reshape(N, C, H, Wp)[:, :, :, :W]

    if bool(cut_network) and cut_network == i_layer + 1:
        # Cut right after conv1/bn1(/relu): single-conv kernel variant.
        out1 = unflatten(_block_call(xp, H, W, [w1], [s1, b1], factor,
                                     do_binarize=do_binarize, num_convs=1,
                                     compute_dtype=compute_dtype))
        return [out1, i_layer + 1, feat_layers, features, cut_network]

    out = unflatten(_block_call(xp, H, W, [w1, w2], [s1, b1, s2, b2], factor,
                                do_binarize=do_binarize, num_convs=2,
                                compute_dtype=compute_dtype))
    i_layer += 2
    if cut_network and cut_network == i_layer:
        return [out, i_layer, feat_layers, features, cut_network]
    if feat_layers and i_layer in feat_layers:
        features[i_layer] = out        # (.detach() has no JAX equivalent/need)
    return [out, i_layer, feat_layers, features, cut_network]


def _conv_nchw(z, w):
    return jax.lax.conv_general_dilated(
        z, w, window_strides=(1, 1), padding="SAME",
        dimension_numbers=("NCHW", "OIHW", "NCHW"))


def _bn_nchw(z, g, b, m, v, eps=1e-5):
    g, b, m, v = (a[None, :, None, None] for a in (g, b, m, v))
    return g * (z - m) / jnp.sqrt(v + eps) + b


def _reference_fp(x_nchw, params, eps=1e-5):
    """Pure-JAX reference (full_precision path); returns (block_out, out1)."""
    x = jnp.maximum(x_nchw, 0.0)
    out1 = jnp.maximum(
        _bn_nchw(_conv_nchw(x, params["w1_oihw"]),
                 params["g1"], params["b1"], params["m1"], params["v1"], eps), 0.0)
    out = _bn_nchw(_conv_nchw(out1, params["w2_oihw"]),
                   params["g2"], params["b2"], params["m2"], params["v2"], eps) + x
    return out, out1


def _reference_bin(x_nchw, params, eps=1e-5):
    """Pure-JAX reference of the modeled do_binarize path."""
    out1 = _bn_nchw(_conv_nchw(x_nchw, params["w1_oihw"]),
                    params["g1"], params["b1"], params["m1"], params["v1"], eps)
    out = _bn_nchw(_conv_nchw(out1, params["w2_oihw"]),
                   params["g2"], params["b2"], params["m2"], params["v2"], eps)
    return out + jnp.abs(x_nchw) * params["move_average_factor"]


if __name__ == "__main__":
    N, C, H, W = 2, 4, 16, 16   # in_planes == planes == 4, stride == 1
    key = jax.random.PRNGKey(0)
    ks = jax.random.split(key, 11)

    x = jax.random.normal(ks[0], (N, C, H, W), jnp.float32)

    fan = C * 9
    w1_oihw = jax.random.normal(ks[1], (C, C, 3, 3), jnp.float32) / math.sqrt(fan)
    w2_oihw = jax.random.normal(ks[2], (C, C, 3, 3), jnp.float32) / math.sqrt(fan)

    params = {
        "w1_oihw": w1_oihw,
        "w2_oihw": w2_oihw,
        "g1": 1.0 + 0.1 * jax.random.normal(ks[3], (C,), jnp.float32),
        "b1": 0.1 * jax.random.normal(ks[4], (C,), jnp.float32),
        "m1": 0.1 * jax.random.normal(ks[5], (C,), jnp.float32),
        "v1": jax.random.uniform(ks[6], (C,), jnp.float32, 0.5, 1.5),
        "g2": 1.0 + 0.1 * jax.random.normal(ks[7], (C,), jnp.float32),
        "b2": 0.1 * jax.random.normal(ks[8], (C,), jnp.float32),
        "m2": 0.1 * jax.random.normal(ks[9], (C,), jnp.float32),
        "v2": jax.random.uniform(ks[10], (C,), jnp.float32, 0.5, 1.5),
        "move_average_factor": jnp.float32(1.0),  # binarized path only
    }

    ref_out, ref_out1 = _reference_fp(x, params)

    # Full block, full_precision path, f32 MXU operands.
    inp = [x, 0, None, {}, None]   # [x, i_layer, feat_layers, features, cut_network]
    out, i_layer, _, _, _ = basic_block_abs(inp, params, do_binarize=False)
    out = jax.block_until_ready(out)
    assert out.shape == (N, C, H, W)
    assert i_layer == 2
    assert jnp.allclose(out, ref_out, atol=2e-4, rtol=2e-4), \
        float(jnp.max(jnp.abs(out - ref_out)))

    # cut_network == 1: block returns right after relu(bn1(conv1(relu(x)))).
    cut_out, cut_i, _, _, _ = basic_block_abs([x, 0, None, {}, 1], params)
    cut_out = jax.block_until_ready(cut_out)
    assert cut_i == 1
    assert jnp.allclose(cut_out, ref_out1, atol=2e-4, rtol=2e-4), \
        float(jnp.max(jnp.abs(cut_out - ref_out1)))

    # Modeled binarized path: no ReLUs, abs(x)*factor shortcut.
    ref_bin = _reference_bin(x, params)
    out_bin, _, _, _, _ = basic_block_abs([x, 0, None, {}, None], params,
                                          do_binarize=True)
    out_bin = jax.block_until_ready(out_bin)
    assert jnp.allclose(out_bin, ref_bin, atol=1e-3, rtol=1e-3), \
        float(jnp.max(jnp.abs(out_bin - ref_bin)))

    # bf16 MXU operands (f32 accumulate / f32 elementwise): loose tolerance.
    out_bf16, _, _, _, _ = basic_block_abs([x, 0, None, {}, None], params,
                                           compute_dtype=jnp.bfloat16)
    out_bf16 = jax.block_until_ready(out_bf16)
    assert jnp.allclose(out_bf16, ref_out, atol=5e-2, rtol=5e-2), \
        float(jnp.max(jnp.abs(out_bf16 - ref_out)))

    print("KERNEL_OK")
</pallas_src>

<mosaic_0001>
module attributes {stable_mosaic.version = 11 : i64} {
  func.func @kernel(%arg0: i32, %arg1: memref<1x4x288xf32, #tpu.memory_space<vmem>>, %arg2: memref<4x36xf32, #tpu.memory_space<vmem>>, %arg3: memref<4x36xf32, #tpu.memory_space<vmem>>, %arg4: memref<4x1xf32, #tpu.memory_space<vmem>>, %arg5: memref<4x1xf32, #tpu.memory_space<vmem>>, %arg6: memref<4x1xf32, #tpu.memory_space<vmem>>, %arg7: memref<4x1xf32, #tpu.memory_space<vmem>>, %arg8: memref<1x4x288xf32, #tpu.memory_space<vmem>>, %arg9: memref<4x326xf32, #tpu.memory_space<vmem>>, %arg10: memref<4x326xf32, #tpu.memory_space<vmem>>, %arg11: memref<36x288xf32, #tpu.memory_space<vmem>>) attributes {dimension_semantics = [#tpu.dimension_semantics<parallel>], iteration_bounds = array<i64: 2>, scalar_prefetch = 0 : i64, scratch_operands = 3 : i64, tpu.core_type = #tpu.core_type<tc>, window_params = [{transform_indices = @transform_0, window_bounds = array<i64: 1, 4, 288>}, {pipeline_mode = #tpu.pipeline_mode<synchronous>, transform_indices = @transform_1, window_bounds = array<i64: 4, 36>}, {pipeline_mode = #tpu.pipeline_mode<synchronous>, transform_indices = @transform_2, window_bounds = array<i64: 4, 36>}, {pipeline_mode = #tpu.pipeline_mode<synchronous>, transform_indices = @transform_3, window_bounds = array<i64: 4, 1>}, {pipeline_mode = #tpu.pipeline_mode<synchronous>, transform_indices = @transform_4, window_bounds = array<i64: 4, 1>}, {pipeline_mode = #tpu.pipeline_mode<synchronous>, transform_indices = @transform_5, window_bounds = array<i64: 4, 1>}, {pipeline_mode = #tpu.pipeline_mode<synchronous>, transform_indices = @transform_6, window_bounds = array<i64: 4, 1>}, {transform_indices = @transform_7, window_bounds = array<i64: 1, 4, 288>}]} {
    %cst = arith.constant 0.000000e+00 : f32
    %0 = vector.broadcast %cst : f32 to vector<4x19xf32>
    %c0 = arith.constant 0 : index
    %c0_0 = arith.constant 0 : index
    %1 = vector.load %arg9[%c0, %c0_0] : memref<4x326xf32, #tpu.memory_space<vmem>>, vector<4x19xf32>
    tpu.vector_store %arg9[%c0, %c0_0], %0 {strides = array<i32>} : memref<4x326xf32, #tpu.memory_space<vmem>>, vector<4x19xf32>,
    %cst_1 = arith.constant 0.000000e+00 : f32
    %2 = vector.broadcast %cst_1 : f32 to vector<4x19xf32>
    %c0_2 = arith.constant 0 : index
    %c307 = arith.constant 307 : index
    %3 = vector.load %arg9[%c0_2, %c307] : memref<4x326xf32, #tpu.memory_space<vmem>>, vector<4x19xf32>
    tpu.vector_store %arg9[%c0_2, %c307], %2 {strides = array<i32>} : memref<4x326xf32, #tpu.memory_space<vmem>>, vector<4x19xf32>,
    %cst_3 = arith.constant 0.000000e+00 : f32
    %4 = vector.broadcast %cst_3 : f32 to vector<4x19xf32>
    %c0_4 = arith.constant 0 : index
    %c0_5 = arith.constant 0 : index
    %5 = vector.load %arg10[%c0_4, %c0_5] : memref<4x326xf32, #tpu.memory_space<vmem>>, vector<4x19xf32>
    tpu.vector_store %arg10[%c0_4, %c0_5], %4 {strides = array<i32>} : memref<4x326xf32, #tpu.memory_space<vmem>>, vector<4x19xf32>,
    %cst_6 = arith.constant 0.000000e+00 : f32
    %6 = vector.broadcast %cst_6 : f32 to vector<4x19xf32>
    %c0_7 = arith.constant 0 : index
    %c307_8 = arith.constant 307 : index
    %7 = vector.load %arg10[%c0_7, %c307_8] : memref<4x326xf32, #tpu.memory_space<vmem>>, vector<4x19xf32>
    tpu.vector_store %arg10[%c0_7, %c307_8], %6 {strides = array<i32>} : memref<4x326xf32, #tpu.memory_space<vmem>>, vector<4x19xf32>,
    %c0_9 = arith.constant 0 : index
    %c0_10 = arith.constant 0 : index
    %c0_11 = arith.constant 0 : index
    %8 = vector.load %arg1[%c0_9, %c0_10, %c0_11] : memref<1x4x288xf32, #tpu.memory_space<vmem>>, vector<1x4x288xf32>
    %9 = vector.shape_cast %8 : vector<1x4x288xf32> to vector<4x288xf32>
    %cst_12 = arith.constant 0.000000e+00 : f32
    %10 = vector.broadcast %cst_12 : f32 to vector<4x288xf32>
    %11 = arith.maximumf %9, %10 : vector<4x288xf32>
    %c0_13 = arith.constant 0 : index
    %c19 = arith.constant 19 : index
    %12 = vector.load %arg9[%c0_13, %c19] : memref<4x326xf32, #tpu.memory_space<vmem>>, vector<4x288xf32>
    tpu.vector_store %arg9[%c0_13, %c19], %11 {strides = array<i32>} : memref<4x326xf32, #tpu.memory_space<vmem>>, vector<4x288xf32>,
    %c0_14 = arith.constant 0 : index
    %c0_15 = arith.constant 0 : index
    %13 = vector.load %arg9[%c0_14, %c0_15] : memref<4x326xf32, #tpu.memory_space<vmem>>, vector<4x288xf32>
    %c0_16 = arith.constant 0 : index
    %c0_17 = arith.constant 0 : index
    %14 = vector.load %arg11[%c0_16, %c0_17] : memref<36x288xf32, #tpu.memory_space<vmem>>, vector<4x288xf32>
    tpu.vector_store %arg11[%c0_16, %c0_17], %13 {strides = array<i32>} : memref<36x288xf32, #tpu.memory_space<vmem>>, vector<4x288xf32>,
    %c0_18 = arith.constant 0 : index
    %c1 = arith.constant 1 : index
    %15 = vector.load %arg9[%c0_18, %c1] : memref<4x326xf32, #tpu.memory_space<vmem>>, vector<4x288xf32>
    %c4 = arith.constant 4 : index
    %c0_19 = arith.constant 0 : index
    %16 = vector.load %arg11[%c4, %c0_19] : memref<36x288xf32, #tpu.memory_space<vmem>>, vector<4x288xf32>
    tpu.vector_store %arg11[%c4, %c0_19], %15 {strides = array<i32>} : memref<36x288xf32, #tpu.memory_space<vmem>>, vector<4x288xf32>,
    %c0_20 = arith.constant 0 : index
    %c2 = arith.constant 2 : index
    %17 = vector.load %arg9[%c0_20, %c2] : memref<4x326xf32, #tpu.memory_space<vmem>>, vector<4x288xf32>
    %c8 = arith.constant 8 : index
    %c0_21 = arith.constant 0 : index
    %18 = vector.load %arg11[%c8, %c0_21] : memref<36x288xf32, #tpu.memory_space<vmem>>, vector<4x288xf32>
    tpu.vector_store %arg11[%c8, %c0_21], %17 {strides = array<i32>} : memref<36x288xf32, #tpu.memory_space<vmem>>, vector<4x288xf32>,
    %c0_22 = arith.constant 0 : index
    %c18 = arith.constant 18 : index
    %19 = vector.load %arg9[%c0_22, %c18] : memref<4x326xf32, #tpu.memory_space<vmem>>, vector<4x288xf32>
    %c12 = arith.constant 12 : index
    %c0_23 = arith.constant 0 : index
    %20 = vector.load %arg11[%c12, %c0_23] : memref<36x288xf32, #tpu.memory_space<vmem>>, vector<4x288xf32>
    tpu.vector_store %arg11[%c12, %c0_23], %19 {strides = array<i32>} : memref<36x288xf32, #tpu.memory_space<vmem>>, vector<4x288xf32>,
    %c0_24 = arith.constant 0 : index
    %c19_25 = arith.constant 19 : index
    %21 = vector.load %arg9[%c0_24, %c19_25] : memref<4x326xf32, #tpu.memory_space<vmem>>, vector<4x288xf32>
    %c16 = arith.constant 16 : index
    %c0_26 = arith.constant 0 : index
    %22 = vector.load %arg11[%c16, %c0_26] : memref<36x288xf32, #tpu.memory_space<vmem>>, vector<4x288xf32>
    tpu.vector_store %arg11[%c16, %c0_26], %21 {strides = array<i32>} : memref<36x288xf32, #tpu.memory_space<vmem>>, vector<4x288xf32>,
    %c0_27 = arith.constant 0 : index
    %c20 = arith.constant 20 : index
    %23 = vector.load %arg9[%c0_27, %c20] : memref<4x326xf32, #tpu.memory_space<vmem>>, vector<4x288xf32>
    %c20_28 = arith.constant 20 : index
    %c0_29 = arith.constant 0 : index
    %24 = vector.load %arg11[%c20_28, %c0_29] : memref<36x288xf32, #tpu.memory_space<vmem>>, vector<4x288xf32>
    tpu.vector_store %arg11[%c20_28, %c0_29], %23 {strides = array<i32>} : memref<36x288xf32, #tpu.memory_space<vmem>>, vector<4x288xf32>,
    %c0_30 = arith.constant 0 : index
    %c36 = arith.constant 36 : index
    %25 = vector.load %arg9[%c0_30, %c36] : memref<4x326xf32, #tpu.memory_space<vmem>>, vector<4x288xf32>
    %c24 = arith.constant 24 : index
    %c0_31 = arith.constant 0 : index
    %26 = vector.load %arg11[%c24, %c0_31] : memref<36x288xf32, #tpu.memory_space<vmem>>, vector<4x288xf32>
    tpu.vector_store %arg11[%c24, %c0_31], %25 {strides = array<i32>} : memref<36x288xf32, #tpu.memory_space<vmem>>, vector<4x288xf32>,
    %c0_32 = arith.constant 0 : index
    %c37 = arith.constant 37 : index
    %27 = vector.load %arg9[%c0_32, %c37] : memref<4x326xf32, #tpu.memory_space<vmem>>, vector<4x288xf32>
    %c28 = arith.constant 28 : index
    %c0_33 = arith.constant 0 : index
    %28 = vector.load %arg11[%c28, %c0_33] : memref<36x288xf32, #tpu.memory_space<vmem>>, vector<4x288xf32>
    tpu.vector_store %arg11[%c28, %c0_33], %27 {strides = array<i32>} : memref<36x288xf32, #tpu.memory_space<vmem>>, vector<4x288xf32>,
    %c0_34 = arith.constant 0 : index
    %c38 = arith.constant 38 : index
    %29 = vector.load %arg9[%c0_34, %c38] : memref<4x326xf32, #tpu.memory_space<vmem>>, vector<4x288xf32>
    %c32 = arith.constant 32 : index
    %c0_35 = arith.constant 0 : index
    %30 = vector.load %arg11[%c32, %c0_35] : memref<36x288xf32, #tpu.memory_space<vmem>>, vector<4x288xf32>
    tpu.vector_store %arg11[%c32, %c0_35], %29 {strides = array<i32>} : memref<36x288xf32, #tpu.memory_space<vmem>>, vector<4x288xf32>,
    %c0_36 = arith.constant 0 : index
    %c0_37 = arith.constant 0 : index
    %31 = vector.load %arg2[%c0_36, %c0_37] : memref<4x36xf32, #tpu.memory_space<vmem>>, vector<4x36xf32>
    %c0_38 = arith.constant 0 : index
    %c0_39 = arith.constant 0 : index
    %32 = vector.load %arg11[%c0_38, %c0_39] : memref<36x288xf32, #tpu.memory_space<vmem>>, vector<36x288xf32>
    %cst_40 = arith.constant dense<0.000000e+00> : vector<4x288xf32>
    %33 = tpu.matmul %31, %32, %cst_40 {dimension_numbers = #tpu.dot_dimension_numbers<[1], [0], [0], [1], [0, 0, 1, 1], [], []>} : vector<4x36xf32>, vector<36x288xf32>, vector<4x288xf32> -> vector<4x288xf32>
    %c0_41 = arith.constant 0 : index
    %c0_42 = arith.constant 0 : index
    %34 = vector.load %arg4[%c0_41, %c0_42] : memref<4x1xf32, #tpu.memory_space<vmem>>, vector<4x1xf32>
    %35 = vector.broadcast %34 : vector<4x1xf32> to vector<4x288xf32>
    %36 = arith.mulf %33, %35 : vector<4x288xf32>
    %c0_43 = arith.constant 0 : index
    %c0_44 = arith.constant 0 : index
    %37 = vector.load %arg5[%c0_43, %c0_44] : memref<4x1xf32, #tpu.memory_space<vmem>>, vector<4x1xf32>
    %38 = vector.broadcast %37 : vector<4x1xf32> to vector<4x288xf32>
    %39 = arith.addf %36, %38 : vector<4x288xf32>
    %cst_45 = arith.constant 0.000000e+00 : f32
    %40 = vector.broadcast %cst_45 : f32 to vector<4x288xf32>
    %41 = arith.maximumf %39, %40 : vector<4x288xf32>
    %42 = tpu.iota {dimensions = array<i32: 1>} : vector<1x288xi32>
    %c18_i32 = arith.constant 18 : i32
    %c0_i32 = arith.constant 0 : i32
    %43 = arith.cmpi eq, %c18_i32, %c0_i32 : i32
    %c1_i32 = arith.constant 1 : i32
    %44 = arith.select %43, %c1_i32, %c18_i32 : i32
    %45 = vector.broadcast %44 : i32 to vector<1x288xi32>
    %46 = arith.remsi %42, %45 : vector<1x288xi32>
    %c0_i32_46 = arith.constant 0 : i32
    %47 = vector.broadcast %c0_i32_46 : i32 to vector<1x288xi32>
    %48 = arith.cmpi ne, %46, %47 : vector<1x288xi32>
    %c0_i32_47 = arith.constant 0 : i32
    %49 = vector.broadcast %c0_i32_47 : i32 to vector<1x288xi32>
    %50 = arith.cmpi slt, %46, %49 : vector<1x288xi32>
    %c0_i32_48 = arith.constant 0 : i32
    %51 = arith.cmpi slt, %44, %c0_i32_48 : i32
    %52 = vector.broadcast %51 : i1 to vector<1x288xi1>
    %53 = vector.broadcast %52 : vector<1x288xi1> to vector<1x288xi1>
    %54 = arith.xori %50, %53 : vector<1x288xi1>
    %55 = arith.andi %54, %48 : vector<1x288xi1>
    %56 = vector.broadcast %44 : i32 to vector<1x288xi32>
    %57 = arith.addi %46, %56 : vector<1x288xi32>
    %58 = arith.select %55, %57, %46 : vector<1x288xi1>, vector<1x288xi32>
    %c16_i32 = arith.constant 16 : i32
    %59 = vector.broadcast %c16_i32 : i32 to vector<1x288xi32>
    %60 = arith.cmpi slt, %58, %59 : vector<1x288xi32>
    %cst_49 = arith.constant 0.000000e+00 : f32
    %61 = vector.shape_cast %60 : vector<1x288xi1> to vector<1x288xi1>
    %62 = vector.broadcast %61 : vector<1x288xi1> to vector<4x288xi1>
    %63 = vector.broadcast %cst_49 : f32 to vector<4x288xf32>
    %64 = arith.select %62, %41, %63 : vector<4x288xi1>, vector<4x288xf32>
    %c0_50 = arith.constant 0 : index
    %c19_51 = arith.constant 19 : index
    %65 = vector.load %arg10[%c0_50, %c19_51] : memref<4x326xf32, #tpu.memory_space<vmem>>, vector<4x288xf32>
    tpu.vector_store %arg10[%c0_50, %c19_51], %64 {strides = array<i32>} : memref<4x326xf32, #tpu.memory_space<vmem>>, vector<4x288xf32>,
    %c0_52 = arith.constant 0 : index
    %c0_53 = arith.constant 0 : index
    %66 = vector.load %arg10[%c0_52, %c0_53] : memref<4x326xf32, #tpu.memory_space<vmem>>, vector<4x288xf32>
    %c0_54 = arith.constant 0 : index
    %c0_55 = arith.constant 0 : index
    %67 = vector.load %arg11[%c0_54, %c0_55] : memref<36x288xf32, #tpu.memory_space<vmem>>, vector<4x288xf32>
    tpu.vector_store %arg11[%c0_54, %c0_55], %66 {strides = array<i32>} : memref<36x288xf32, #tpu.memory_space<vmem>>, vector<4x288xf32>,
    %c0_56 = arith.constant 0 : index
    %c1_57 = arith.constant 1 : index
    %68 = vector.load %arg10[%c0_56, %c1_57] : memref<4x326xf32, #tpu.memory_space<vmem>>, vector<4x288xf32>
    %c4_58 = arith.constant 4 : index
    %c0_59 = arith.constant 0 : index
    %69 = vector.load %arg11[%c4_58, %c0_59] : memref<36x288xf32, #tpu.memory_space<vmem>>, vector<4x288xf32>
    tpu.vector_store %arg11[%c4_58, %c0_59], %68 {strides = array<i32>} : memref<36x288xf32, #tpu.memory_space<vmem>>, vector<4x288xf32>,
    %c0_60 = arith.constant 0 : index
    %c2_61 = arith.constant 2 : index
    %70 = vector.load %arg10[%c0_60, %c2_61] : memref<4x326xf32, #tpu.memory_space<vmem>>, vector<4x288xf32>
    %c8_62 = arith.constant 8 : index
    %c0_63 = arith.constant 0 : index
    %71 = vector.load %arg11[%c8_62, %c0_63] : memref<36x288xf32, #tpu.memory_space<vmem>>, vector<4x288xf32>
    tpu.vector_store %arg11[%c8_62, %c0_63], %70 {strides = array<i32>} : memref<36x288xf32, #tpu.memory_space<vmem>>, vector<4x288xf32>,
    %c0_64 = arith.constant 0 : index
    %c18_65 = arith.constant 18 : index
    %72 = vector.load %arg10[%c0_64, %c18_65] : memref<4x326xf32, #tpu.memory_space<vmem>>, vector<4x288xf32>
    %c12_66 = arith.constant 12 : index
    %c0_67 = arith.constant 0 : index
    %73 = vector.load %arg11[%c12_66, %c0_67] : memref<36x288xf32, #tpu.memory_space<vmem>>, vector<4x288xf32>
    tpu.vector_store %arg11[%c12_66, %c0_67], %72 {strides = array<i32>} : memref<36x288xf32, #tpu.memory_space<vmem>>, vector<4x288xf32>,
    %c0_68 = arith.constant 0 : index
    %c19_69 = arith.constant 19 : index
    %74 = vector.load %arg10[%c0_68, %c19_69] : memref<4x326xf32, #tpu.memory_space<vmem>>, vector<4x288xf32>
    %c16_70 = arith.constant 16 : index
    %c0_71 = arith.constant 0 : index
    %75 = vector.load %arg11[%c16_70, %c0_71] : memref<36x288xf32, #tpu.memory_space<vmem>>, vector<4x288xf32>
    tpu.vector_store %arg11[%c16_70, %c0_71], %74 {strides = array<i32>} : memref<36x288xf32, #tpu.memory_space<vmem>>, vector<4x288xf32>,
    %c0_72 = arith.constant 0 : index
    %c20_73 = arith.constant 20 : index
    %76 = vector.load %arg10[%c0_72, %c20_73] : memref<4x326xf32, #tpu.memory_space<vmem>>, vector<4x288xf32>
    %c20_74 = arith.constant 20 : index
    %c0_75 = arith.constant 0 : index
    %77 = vector.load %arg11[%c20_74, %c0_75] : memref<36x288xf32, #tpu.memory_space<vmem>>, vector<4x288xf32>
    tpu.vector_store %arg11[%c20_74, %c0_75], %76 {strides = array<i32>} : memref<36x288xf32, #tpu.memory_space<vmem>>, vector<4x288xf32>,
    %c0_76 = arith.constant 0 : index
    %c36_77 = arith.constant 36 : index
    %78 = vector.load %arg10[%c0_76, %c36_77] : memref<4x326xf32, #tpu.memory_space<vmem>>, vector<4x288xf32>
    %c24_78 = arith.constant 24 : index
    %c0_79 = arith.constant 0 : index
    %79 = vector.load %arg11[%c24_78, %c0_79] : memref<36x288xf32, #tpu.memory_space<vmem>>, vector<4x288xf32>
    tpu.vector_store %arg11[%c24_78, %c0_79], %78 {strides = array<i32>} : memref<36x288xf32, #tpu.memory_space<vmem>>, vector<4x288xf32>,
    %c0_80 = arith.constant 0 : index
    %c37_81 = arith.constant 37 : index
    %80 = vector.load %arg10[%c0_80, %c37_81] : memref<4x326xf32, #tpu.memory_space<vmem>>, vector<4x288xf32>
    %c28_82 = arith.constant 28 : index
    %c0_83 = arith.constant 0 : index
    %81 = vector.load %arg11[%c28_82, %c0_83] : memref<36x288xf32, #tpu.memory_space<vmem>>, vector<4x288xf32>
    tpu.vector_store %arg11[%c28_82, %c0_83], %80 {strides = array<i32>} : memref<36x288xf32, #tpu.memory_space<vmem>>, vector<4x288xf32>,
    %c0_84 = arith.constant 0 : index
    %c38_85 = arith.constant 38 : index
    %82 = vector.load %arg10[%c0_84, %c38_85] : memref<4x326xf32, #tpu.memory_space<vmem>>, vector<4x288xf32>
    %c32_86 = arith.constant 32 : index
    %c0_87 = arith.constant 0 : index
    %83 = vector.load %arg11[%c32_86, %c0_87] : memref<36x288xf32, #tpu.memory_space<vmem>>, vector<4x288xf32>
    tpu.vector_store %arg11[%c32_86, %c0_87], %82 {strides = array<i32>} : memref<36x288xf32, #tpu.memory_space<vmem>>, vector<4x288xf32>,
    %c0_88 = arith.constant 0 : index
    %c0_89 = arith.constant 0 : index
    %84 = vector.load %arg3[%c0_88, %c0_89] : memref<4x36xf32, #tpu.memory_space<vmem>>, vector<4x36xf32>
    %c0_90 = arith.constant 0 : index
    %c0_91 = arith.constant 0 : index
    %85 = vector.load %arg11[%c0_90, %c0_91] : memref<36x288xf32, #tpu.memory_space<vmem>>, vector<36x288xf32>
    %cst_92 = arith.constant dense<0.000000e+00> : vector<4x288xf32>
    %86 = tpu.matmul %84, %85, %cst_92 {dimension_numbers = #tpu.dot_dimension_numbers<[1], [0], [0], [1], [0, 0, 1, 1], [], []>} : vector<4x36xf32>, vector<36x288xf32>, vector<4x288xf32> -> vector<4x288xf32>
    %c0_93 = arith.constant 0 : index
    %c0_94 = arith.constant 0 : index
    %87 = vector.load %arg6[%c0_93, %c0_94] : memref<4x1xf32, #tpu.memory_space<vmem>>, vector<4x1xf32>
    %88 = vector.broadcast %87 : vector<4x1xf32> to vector<4x288xf32>
    %89 = arith.mulf %86, %88 : vector<4x288xf32>
    %c0_95 = arith.constant 0 : index
    %c0_96 = arith.constant 0 : index
    %90 = vector.load %arg7[%c0_95, %c0_96] : memref<4x1xf32, #tpu.memory_space<vmem>>, vector<4x1xf32>
    %91 = vector.broadcast %90 : vector<4x1xf32> to vector<4x288xf32>
    %92 = arith.addf %89, %91 : vector<4x288xf32>
    %c0_97 = arith.constant 0 : index
    %c19_98 = arith.constant 19 : index
    %93 = vector.load %arg9[%c0_97, %c19_98] : memref<4x326xf32, #tpu.memory_space<vmem>>, vector<4x288xf32>
    %94 = arith.addf %92, %93 : vector<4x288xf32>
    %c0_99 = arith.constant 0 : index
    %c0_100 = arith.constant 0 : index
    %c0_101 = arith.constant 0 : index
    %95 = vector.load %arg8[%c0_99, %c0_100, %c0_101] : memref<1x4x288xf32, #tpu.memory_space<vmem>>, vector<1x4x288xf32>
    %96 = vector.shape_cast %95 : vector<1x4x288xf32> to vector<4x288xf32>
    %97 = vector.shape_cast %94 : vector<4x288xf32> to vector<1x4x288xf32>
    tpu.vector_store %arg8[%c0_99, %c0_100, %c0_101], %97 {strides = array<i32>} : memref<1x4x288xf32, #tpu.memory_space<vmem>>, vector<1x4x288xf32>,
    return
  }
  func.func @transform_0(%arg0: i32) -> (i32, i32, i32) {
    %c0_i32 = arith.constant 0 : i32
    %c0_i32_0 = arith.constant 0 : i32
    %c0_i32_1 = arith.constant 0 : i32
    return %arg0, %c0_i32, %c0_i32_0 : i32, i32, i32
  }
  func.func @transform_1(%arg0: i32) -> (i32, i32) {
    %c0_i32 = arith.constant 0 : i32
    %c0_i32_0 = arith.constant 0 : i32
    %c0_i32_1 = arith.constant 0 : i32
    return %c0_i32, %c0_i32_0 : i32, i32
  }
  func.func @transform_2(%arg0: i32) -> (i32, i32) {
    %c0_i32 = arith.constant 0 : i32
    %c0_i32_0 = arith.constant 0 : i32
    %c0_i32_1 = arith.constant 0 : i32
    return %c0_i32, %c0_i32_0 : i32, i32
  }
  func.func @transform_3(%arg0: i32) -> (i32, i32) {
    %c0_i32 = arith.constant 0 : i32
    %c0_i32_0 = arith.constant 0 : i32
    %c0_i32_1 = arith.constant 0 : i32
    return %c0_i32, %c0_i32_0 : i32, i32
  }
  func.func @transform_4(%arg0: i32) -> (i32, i32) {
    %c0_i32 = arith.constant 0 : i32
    %c0_i32_0 = arith.constant 0 : i32
    %c0_i32_1 = arith.constant 0 : i32
    return %c0_i32, %c0_i32_0 : i32, i32
  }
  func.func @transform_5(%arg0: i32) -> (i32, i32) {
    %c0_i32 = arith.constant 0 : i32
    %c0_i32_0 = arith.constant 0 : i32
    %c0_i32_1 = arith.constant 0 : i32
    return %c0_i32, %c0_i32_0 : i32, i32
  }
  func.func @transform_6(%arg0: i32) -> (i32, i32) {
    %c0_i32 = arith.constant 0 : i32
    %c0_i32_0 = arith.constant 0 : i32
    %c0_i32_1 = arith.constant 0 : i32
    return %c0_i32, %c0_i32_0 : i32, i32
  }
  func.func @transform_7(%arg0: i32) -> (i32, i32, i32) {
    %c0_i32 = arith.constant 0 : i32
    %c0_i32_0 = arith.constant 0 : i32
    %c0_i32_1 = arith.constant 0 : i32
    return %arg0, %c0_i32, %c0_i32_0 : i32, i32, i32
  }
}

</mosaic_0001>

<llo_original>
// kernel: tpu_custom_call.1
$region0: #{tpu_custom_call.1}
  #allocation0 [shape = 'u32[]', space=smem, size = 0x4, offset = 0x4, fixed_abs, tag = 'smem constant byte address 0x4 - core index']
  #allocation1 [shape = 'u32[144,128]{1,0:T(1,128)}', space=vmem, size = 0x12000, scoped, tag = 'internal scratch']
  #allocation2 [shape = 'f32[4,326]{1,0:T(4,128)}', space=vmem, size = 0x1800, scoped, tag = 'scratch operand']
  #allocation3 [shape = 'f32[4,326]{1,0:T(4,128)}', space=vmem, size = 0x1800, scoped, tag = 'scratch operand']
  #allocation4 [shape = 'f32[36,288]{1,0:T(8,128)}', space=vmem, size = 0xf000, scoped, tag = 'scratch operand']
  %s0 = inlined_call_operand.hbm [shape: f32[2,4,288], index: 0, kind: input, shape index: {}]
  %s1 = inlined_call_operand.vmem [shape: f32[4,36], index: 1, kind: input, shape index: {}]
  %s2 = inlined_call_operand.vmem [shape: f32[4,36], index: 2, kind: input, shape index: {}]
  %s3 = inlined_call_operand.vmem [shape: f32[4,1], index: 3, kind: input, shape index: {}]
  %s4 = inlined_call_operand.vmem [shape: f32[4,1], index: 4, kind: input, shape index: {}]
  %s5 = inlined_call_operand.vmem [shape: f32[4,1], index: 5, kind: input, shape index: {}]
  %s6 = inlined_call_operand.vmem [shape: f32[4,1], index: 6, kind: input, shape index: {}]
  %s7 = inlined_call_operand.hbm [shape: f32[2,4,288], index: 7, kind: output, shape index: {}]
  %s8 = sld [smem:[#allocation0]]
  $region65: #{tpu_custom_call.1} parent=0
    _
  %s10 = ssub.s32 1, %s8
  %s11 = scalar_select 0, %s10, %s8
  $region1: #{tpu_custom_call.1} parent=0
    #allocation5 [shape = 'u8[12288]{0}', space=vmem, size = 0x3000, scoped, tag = 'input window, operand 0']
    #allocation6 [shape = 's32[2]{0}', space=sflag, size = 0x8, scoped, tag = 'scoped memory for tpu_custom_call.1']
    #allocation7 [shape = 's32[2]{0}', space=sflag, size = 0x8, scoped, tag = 'scoped memory for tpu_custom_call.1']
    #allocation8 [shape = 'u8[12288]{0}', space=vmem, size = 0x3000, scoped, tag = 'output window, operand 0']
    %12 = vsyncpa [#allocation6], 0
    %s13 = scalar_lea.sflag [#allocation6], 1
    %14 = vsyncpa %s13, 0
    %15 = vsyncpa [#allocation7], 0
    %s16 = scalar_lea.sflag [#allocation7], 1
    %17 = vsyncpa %s16, 0
    loop: start=0, step=1, limit=4
    $region2: #{tpu_custom_call.1} parent=1 // loop_pre_header
      _
    $region3: #{tpu_custom_call.1} parent=1 // loop_header
      %s19 = sphi 0, %s23
      %p20 = scmp.ge.s32.totalorder %s19, 4
      %s29 = sphi 0, %s31
      %s32 = sphi 0, %s29
      %s33 = sphi 0, %s32
      %s49 = sphi 0, %s33
      %s53 = sphi 0, %s53
      %s55 = sphi 0, %s53
      %s56 = sphi 0, %s55
      %s70 = sphi 0, %s56
      %s74 = sphi 0, %s74
      %s76 = sphi 0, %s74
      %s77 = sphi 0, %s76
      %s91 = sphi 0, %s77
      %s95 = sphi 0, %s95
      %s97 = sphi 0, %s95
      %s98 = sphi 0, %s97
      %s112 = sphi 0, %s98
      %s116 = sphi 0, %s116
      %s118 = sphi 0, %s116
      %s119 = sphi 0, %s118
      %s133 = sphi 0, %s119
      %s137 = sphi 0, %s137
      %s139 = sphi 0, %s137
      %s140 = sphi 0, %s139
      %s154 = sphi 0, %s140
      %s158 = sphi 0, %s158
      %s160 = sphi 0, %s158
      %s161 = sphi 0, %s160
      %s175 = sphi 0, %s161
      %s181 = sphi 0, %s183
      %s184 = sphi 0, %s181
      %s185 = sphi 0, %s184
      %s201 = sphi 0, %s185
    $region4: #{tpu_custom_call.1} parent=1 // loop_header_branch
      %22 = sbr.rel (%p20) target = $region8
    $region5: #{tpu_custom_call.1} parent=1 // loop_body
      %s24 = ssub.s32 %s19, 1
      %s25 = ssub.s32 %s19, 2
      %s26 = sadd.s32 %s19, 1
      %s27 = ssub.s32 %s19, %s26
      %p28 = scmp.eq.s32.totalorder %s27, 0
      %s30 = sadd.s32 %s29, 1
      %s31 = scalar_select %p28, %s29, %s30
      %p34 = pneg %p28
      %p35 = scmp.eq.s32.totalorder %s19, 1
      %p36 = por %p34, %p35
      %p37 = scmp.ne.s32.totalorder %s29, %s32
      %p38 = scmp.eq.s32.totalorder %s19, 0
      %p39 = por %p37, %p38
      %p40 = scmp.ne.s32.totalorder %s29, %s32
      %p41 = scmp.eq.s32.totalorder %s24, 1
      %p42 = por %p40, %p41
      %p43 = scmp.ne.s32.totalorder %s32, %s33
      %p44 = scmp.eq.s32.totalorder %s24, 0
      %p45 = por %p43, %p44
      %p46 = scmp.ne.s32.totalorder %s32, %s33
      %p47 = scmp.eq.s32.totalorder %s25, 1
      %p48 = por %p46, %p47
      %p50 = scmp.ne.s32.totalorder %s33, %s49
      %p51 = scmp.eq.s32.totalorder %s25, 0
      %p52 = por %p50, %p51
      %s54 = sadd.s32 %s53, 1
      %p57 = scmp.eq.s32.totalorder %s19, 1
      %p58 = scmp.ne.s32.totalorder %s53, %s55
      %p59 = scmp.eq.s32.totalorder %s19, 0
      %p60 = por %p58, %p59
      %p61 = scmp.ne.s32.totalorder %s53, %s55
      %p62 = scmp.eq.s32.totalorder %s24, 1
      %p63 = por %p61, %p62
      %p64 = scmp.ne.s32.totalorder %s55, %s56
      %p65 = scmp.eq.s32.totalorder %s24, 0
      %p66 = por %p64, %p65
      %p67 = scmp.ne.s32.totalorder %s55, %s56
      %p68 = scmp.eq.s32.totalorder %s25, 1
      %p69 = por %p67, %p68
      %p71 = scmp.ne.s32.totalorder %s56, %s70
      %p72 = scmp.eq.s32.totalorder %s25, 0
      %p73 = por %p71, %p72
      %s75 = sadd.s32 %s74, 1
      %p78 = scmp.eq.s32.totalorder %s19, 1
      %p79 = scmp.ne.s32.totalorder %s74, %s76
      %p80 = scmp.eq.s32.totalorder %s19, 0
      %p81 = por %p79, %p80
      %p82 = scmp.ne.s32.totalorder %s74, %s76
      %p83 = scmp.eq.s32.totalorder %s24, 1
      %p84 = por %p82, %p83
      %p85 = scmp.ne.s32.totalorder %s76, %s77
      %p86 = scmp.eq.s32.totalorder %s24, 0
      %p87 = por %p85, %p86
      %p88 = scmp.ne.s32.totalorder %s76, %s77
      %p89 = scmp.eq.s32.totalorder %s25, 1
      %p90 = por %p88, %p89
      %p92 = scmp.ne.s32.totalorder %s77, %s91
      %p93 = scmp.eq.s32.totalorder %s25, 0
      %p94 = por %p92, %p93
      %s96 = sadd.s32 %s95, 1
      %p99 = scmp.eq.s32.totalorder %s19, 1
      %p100 = scmp.ne.s32.totalorder %s95, %s97
      %p101 = scmp.eq.s32.totalorder %s19, 0
      %p102 = por %p100, %p101
      %p103 = scmp.ne.s32.totalorder %s95, %s97
      %p104 = scmp.eq.s32.totalorder %s24, 1
      %p105 = por %p103, %p104
      %p106 = scmp.ne.s32.totalorder %s97, %s98
      %p107 = scmp.eq.s32.totalorder %s24, 0
      %p108 = por %p106, %p107
      %p109 = scmp.ne.s32.totalorder %s97, %s98
      %p110 = scmp.eq.s32.totalorder %s25, 1
      %p111 = por %p109, %p110
      %p113 = scmp.ne.s32.totalorder %s98, %s112
      %p114 = scmp.eq.s32.totalorder %s25, 0
      %p115 = por %p113, %p114
      %s117 = sadd.s32 %s116, 1
      %p120 = scmp.eq.s32.totalorder %s19, 1
      %p121 = scmp.ne.s32.totalorder %s116, %s118
      %p122 = scmp.eq.s32.totalorder %s19, 0
      %p123 = por %p121, %p122
      %p124 = scmp.ne.s32.totalorder %s116, %s118
      %p125 = scmp.eq.s32.totalorder %s24, 1
      %p126 = por %p124, %p125
      %p127 = scmp.ne.s32.totalorder %s118, %s119
      %p128 = scmp.eq.s32.totalorder %s24, 0
      %p129 = por %p127, %p128
      %p130 = scmp.ne.s32.totalorder %s118, %s119
      %p131 = scmp.eq.s32.totalorder %s25, 1
      %p132 = por %p130, %p131
      %p134 = scmp.ne.s32.totalorder %s119, %s133
      %p135 = scmp.eq.s32.totalorder %s25, 0
      %p136 = por %p134, %p135
      %s138 = sadd.s32 %s137, 1
      %p141 = scmp.eq.s32.totalorder %s19, 1
      %p142 = scmp.ne.s32.totalorder %s137, %s139
      %p143 = scmp.eq.s32.totalorder %s19, 0
      %p144 = por %p142, %p143
      %p145 = scmp.ne.s32.totalorder %s137, %s139
      %p146 = scmp.eq.s32.totalorder %s24, 1
      %p147 = por %p145, %p146
      %p148 = scmp.ne.s32.totalorder %s139, %s140
      %p149 = scmp.eq.s32.totalorder %s24, 0
      %p150 = por %p148, %p149
      %p151 = scmp.ne.s32.totalorder %s139, %s140
      %p152 = scmp.eq.s32.totalorder %s25, 1
      %p153 = por %p151, %p152
      %p155 = scmp.ne.s32.totalorder %s140, %s154
      %p156 = scmp.eq.s32.totalorder %s25, 0
      %p157 = por %p155, %p156
      %s159 = sadd.s32 %s158, 1
      %p162 = scmp.eq.s32.totalorder %s19, 1
      %p163 = scmp.ne.s32.totalorder %s158, %s160
      %p164 = scmp.eq.s32.totalorder %s19, 0
      %p165 = por %p163, %p164
      %p166 = scmp.ne.s32.totalorder %s158, %s160
      %p167 = scmp.eq.s32.totalorder %s24, 1
      %p168 = por %p166, %p167
      %p169 = scmp.ne.s32.totalorder %s160, %s161
      %p170 = scmp.eq.s32.totalorder %s24, 0
      %p171 = por %p169, %p170
      %p172 = scmp.ne.s32.totalorder %s160, %s161
      %p173 = scmp.eq.s32.totalorder %s25, 1
      %p174 = por %p172, %p173
      %p176 = scmp.ne.s32.totalorder %s161, %s175
      %p177 = scmp.eq.s32.totalorder %s25, 0
      %p178 = por %p176, %p177
      %s179 = ssub.s32 %s19, %s26
      %p180 = scmp.eq.s32.totalorder %s179, 0
      %s182 = sadd.s32 %s181, 1
      %s183 = scalar_select %p180, %s181, %s182
      %p186 = pneg %p180
      %p187 = scmp.eq.s32.totalorder %s19, 1
      %p188 = por %p186, %p187
      %p189 = scmp.ne.s32.totalorder %s181, %s184
      %p190 = scmp.eq.s32.totalorder %s19, 0
      %p191 = por %p189, %p190
      %p192 = scmp.ne.s32.totalorder %s181, %s184
      %p193 = scmp.eq.s32.totalorder %s24, 1
      %p194 = por %p192, %p193
      %p195 = scmp.ne.s32.totalorder %s184, %s185
      %p196 = scmp.eq.s32.totalorder %s24, 0
      %p197 = por %p195, %p196
      %p198 = scmp.ne.s32.totalorder %s184, %s185
      %p199 = scmp.eq.s32.totalorder %s25, 1
      %p200 = por %p198, %p199
      %p202 = scmp.ne.s32.totalorder %s185, %s201
      %p203 = scmp.eq.s32.totalorder %s25, 0
      %p204 = por %p202, %p203
      %p205 = scmp.le.s32.totalorder 1, %s19
      %p206 = scmp.lt.s32.totalorder %s19, 3
      %p207 = pnand %p205, %p206
      %p208 = pneg %p207
      // Predicated region
      $region9: #{tpu_custom_call.1} parent=5 // pred_check
        _
      $region10: #{tpu_custom_call.1} parent=5 // pred_check_branch
        %210 = sbr.rel (%p207) target = $region12
      $region11: #{tpu_custom_call.1} parent=5 // pred_region
        %s211 = ssub.s32 %s19, 1
        // Predicated region
        $region13: #{tpu_custom_call.1} parent=11 // pred_check
          %p212 = pneg %p66
        $region14: #{tpu_custom_call.1} parent=11 // pred_check_branch
          %214 = sbr.rel (%p212) target = $region16
        $region15: #{tpu_custom_call.1} parent=11 // pred_region
          _
        $region16: #{tpu_custom_call.1} parent=11 // pred_fallthru
          _
        // Predicated region
        $region17: #{tpu_custom_call.1} parent=11 // pred_check
          %p215 = pneg %p87
        $region18: #{tpu_custom_call.1} parent=11 // pred_check_branch
          %217 = sbr.rel (%p215) target = $region20
        $region19: #{tpu_custom_call.1} parent=11 // pred_region
          _
        $region20: #{tpu_custom_call.1} parent=11 // pred_fallthru
          _
        // Predicated region
        $region21: #{tpu_custom_call.1} parent=11 // pred_check
          %p218 = pneg %p108
        $region22: #{tpu_custom_call.1} parent=11 // pred_check_branch
          %220 = sbr.rel (%p218) target = $region24
        $region23: #{tpu_custom_call.1} parent=11 // pred_region
          _
        $region24: #{tpu_custom_call.1} parent=11 // pred_fallthru
          _
        // Predicated region
        $region25: #{tpu_custom_call.1} parent=11 // pred_check
          %p221 = pneg %p129
        $region26: #{tpu_custom_call.1} parent=11 // pred_check_branch
          %223 = sbr.rel (%p221) target = $region28
        $region27: #{tpu_custom_call.1} parent=11 // pred_region
          _
        $region28: #{tpu_custom_call.1} parent=11 // pred_fallthru
          _
        // Predicated region
        $region29: #{tpu_custom_call.1} parent=11 // pred_check
          %p224 = pneg %p150
        $region30: #{tpu_custom_call.1} parent=11 // pred_check_branch
          %226 = sbr.rel (%p224) target = $region32
        $region31: #{tpu_custom_call.1} parent=11 // pred_region
          _
        $region32: #{tpu_custom_call.1} parent=11 // pred_fallthru
          _
        // Predicated region
        $region33: #{tpu_custom_call.1} parent=11 // pred_check
          %p227 = pneg %p171
        $region34: #{tpu_custom_call.1} parent=11 // pred_check_branch
          %229 = sbr.rel (%p227) target = $region36
        $region35: #{tpu_custom_call.1} parent=11 // pred_region
          _
        $region36: #{tpu_custom_call.1} parent=11 // pred_fallthru
          _
      $region12: #{tpu_custom_call.1} parent=5 // pred_fallthru
        _
      %p230 = scmp.lt.s32.totalorder %s19, 2
      // Predicated region
      $region37: #{tpu_custom_call.1} parent=5 // pred_check
        %p231 = pneg %p230
      $region38: #{tpu_custom_call.1} parent=5 // pred_check_branch
        %233 = sbr.rel (%p231) target = $region40
      $region39: #{tpu_custom_call.1} parent=5 // pred_region
        // Predicated region
        $region41: #{tpu_custom_call.1} parent=39 // pred_check
          %p234 = pneg %p39
        $region42: #{tpu_custom_call.1} parent=39 // pred_check_branch
          %236 = sbr.rel (%p234) target = $region44
        $region43: #{tpu_custom_call.1} parent=39 // pred_region
          %s237 = sand.u32 %s29, 1
          %s238 = scalar_lea.sflag [#allocation6], %s237
          %s239 = sand.u32 %s29, 1
          %s240 = smul.addr %s239, 12
          %s241 = scalar_lea.vmem [#allocation5], %s240
          %s243 = ssub.s32 192, 192
          %244 = vsyncadd %s238, %s243
          %s245 = smul.addr %s19, 3
          %s246 = smul.addr %s245, 64
          %s247 = scalar_lea.hbm %s0, %s246
          %s249 = sshll.u32 %s241, 4
          %s250 = int_to_ptr.vmem [resolvable:$true] %s249
          %252 = dma.hbm_to_vmem [thread:$0]  %s247, 192, %s250, %s238
        $region44: #{tpu_custom_call.1} parent=39 // pred_fallthru
          _
      $region40: #{tpu_custom_call.1} parent=5 // pred_fallthru
        _
      %p253 = scmp.le.s32.totalorder 1, %s19
      %p254 = scmp.lt.s32.totalorder %s19, 3
      %p255 = pnand %p253, %p254
      %p256 = pneg %p255
      // Predicated region
      $region45: #{tpu_custom_call.1} parent=5 // pred_check
        _
      $region46: #{tpu_custom_call.1} parent=5 // pred_check_branch
        %258 = sbr.rel (%p255) target = $region48
      $region47: #{tpu_custom_call.1} parent=5 // pred_region
        %s259 = ssub.s32 %s19, 1
        %s260 = sand.u32 %s32, 1
        %s261 = scalar_lea.sflag [#allocation6], %s260
        %s262 = sand.u32 %s32, 1
        %s263 = smul.addr %s262, 12
        %s264 = scalar_lea.vmem [#allocation5], %s263
        // Predicated region
        $region49: #{tpu_custom_call.1} parent=47 // pred_check
          %p265 = pneg %p45
        $region50: #{tpu_custom_call.1} parent=47 // pred_check_branch
          %267 = sbr.rel (%p265) target = $region52
        $region51: #{tpu_custom_call.1} parent=47 // pred_region
          %268 = dma.done %s261, 192
        $region52: #{tpu_custom_call.1} parent=47 // pred_fallthru
          _
        %s269 = sand.u32 %s32, 1
        %s270 = scalar_lea.sflag [#allocation6], %s269
        %s271 = sand.u32 %s32, 1
        %s272 = smul.addr %s271, 12
        %s273 = scalar_lea.vmem [#allocation5], %s272
        %p274 = pneg %p45
        %p275 = pneg %p42
        %p276 = pneg %p66
        %p277 = pneg %p63
        %p278 = pneg %p87
        %p279 = pneg %p84
        %p280 = pneg %p108
        %p281 = pneg %p105
        %p282 = pneg %p129
        %p283 = pneg %p126
        %p284 = pneg %p150
        %p285 = pneg %p147
        %p286 = pneg %p171
        %p287 = pneg %p168
        %p288 = pneg %p197
        %p289 = pneg %p194
        %s290 = sand.u32 %s184, 1
        %s291 = scalar_lea.sflag [#allocation7], %s290
        %s292 = sand.u32 %s184, 1
        %s293 = smul.addr %s292, 12
        %s294 = scalar_lea.vmem [#allocation8], %s293
        %vm295 = vcmask 150528
        %296 = vst.msk [vmem:[#allocation2] sm:$0xf] %vm295, 0.0
        %vm297 = vcmask 568728
        %298 = vst.msk [vmem:[#allocation2 + $0x8] sm:$0xf] %vm297, 0.0
        %299 = vst.msk [vmem:[#allocation3] sm:$0xf] %vm295, 0.0
        %300 = vst.msk [vmem:[#allocation3 + $0x8] sm:$0xf] %vm297, 0.0
        %v301 = vld [vmem:[%s264] sm:$0xff]
        %v302 = vld [vmem:[%s264 + $0x8] sm:$0xf]
        %v303 = vmax.f32 %v301, 0.0
        %v304 = vmax.f32 %v302, 0.0
        %307 = vrot.lane.b32.xlu0 %v303, 19
        %v308 = vpop.permute.xlu0 %307
        %309 = vrot.lane.b32.xlu0 %v304, 19
        %v310 = vpop.permute.xlu0 %309
        %v311 = vrot.slane %v308, 4
        %vm312 = vcmask 154624
        %v313 = vsel %vm312, %v311, %v308
        %v314 = vsel %vm312, %v311, %v310
        %vm317 = vcmask 1043608
        %vm318 = vcmask 1047556
        %vm319 = vmor %vm318, %vm317
        %320 = vst.msk [vmem:[#allocation2] sm:$0xff] %vm319, %v313
        %vm321 = vcmask 412672
        %322 = vst.msk [vmem:[#allocation2 + $0x8] sm:$0xf] %vm321, %v314
        %v323 = vld [vmem:[#allocation2] sm:$0xff]
        %v324 = vld [vmem:[#allocation2 + $0x8] sm:$0xf]
        %v326 = vcombine.high %v323, %v323
        %328 = vst [vmem:[#allocation4] sm:$0xf] %v323
        %329 = vst [vmem:[#allocation4 + $0x8] sm:$0xf] %v326
        %vm330 = vcmask 257024
        %331 = vst.msk [vmem:[#allocation4 + $0x10] sm:$0xf] %vm330, %v324
        %v332 = vld [vmem:[#allocation2] sm:$0xff]
        %v333 = vld [vmem:[#allocation2 + $0x8] sm:$0xf]
        %v336 = vcombine.low %v332, %v332
        %v337 = vcombine.low %v333, %v333
        %338 = vrot.lane.b32.xlu0 %v336, 127
        %v339 = vpop.permute.xlu0 %338
        %340 = vrot.lane.b32.xlu0 %v332, 127
        %v341 = vpop.permute.xlu0 %340
        %342 = vrot.lane.b32.xlu0 %v337, 127
        %v343 = vpop.permute.xlu0 %342
        %vm344 = vcmask 1039360
        %v345 = vsel %vm344, %v339, %v341
        %v346 = vsel %vm344, %v341, %v343
        %350 = vst [vmem:[#allocation4] sm:$0xf0] %v345
        %351 = vst [vmem:[#allocation4 + $0x8] sm:$0xf0] %v346
        %vm352 = vcmask 261124
        %353 = vst.msk [vmem:[#allocation4 + $0x10] sm:$0xf0] %vm352, %v343
        %v354 = vld [vmem:[#allocation2] sm:$0xff]
        %v355 = vld [vmem:[#allocation2 + $0x8] sm:$0xf]
        %v358 = vcombine.high %v354, %v354
        %359 = vrot.lane.b32.xlu0 %v354, 126
        %v360 = vpop.permute.xlu0 %359
        %361 = vrot.lane.b32.xlu0 %v358, 126
        %v362 = vpop.permute.xlu0 %361
        %363 = vrot.lane.b32.xlu0 %v355, 126
        %v364 = vpop.permute.xlu0 %363
        %vm365 = vcmask 1031168
        %v366 = vsel %vm365, %v360, %v362
        %v367 = vsel %vm365, %v362, %v364
        %371 = vst [vmem:[#allocation4 + $0x18] sm:$0xf] %v366
        %372 = vst [vmem:[#allocation4 + $0x20] sm:$0xf] %v367
        %373 = vst.msk [vmem:[#allocation4 + $0x28] sm:$0xf] %vm330, %v364
        %v374 = vld [vmem:[#allocation2] sm:$0xff]
        %v375 = vld [vmem:[#allocation2 + $0x8] sm:$0xf]
        %v378 = vcombine.low %v374, %v374
        %v379 = vcombine.low %v375, %v375
        %380 = vrot.lane.b32.xlu0 %v378, 110
        %v381 = vpop.permute.xlu0 %380
        %382 = vrot.lane.b32.xlu0 %v374, 110
        %v383 = vpop.permute.xlu0 %382
        %384 = vrot.lane.b32.xlu0 %v379, 110
        %v385 = vpop.permute.xlu0 %384
        %vm386 = vcmask 900096
        %v387 = vsel %vm386, %v381, %v383
        %v388 = vsel %vm386, %v383, %v385
        %392 = vst [vmem:[#allocation4 + $0x18] sm:$0xf0] %v387
        %393 = vst [vmem:[#allocation4 + $0x20] sm:$0xf0] %v388
        %394 = vst.msk [vmem:[#allocation4 + $0x28] sm:$0xf0] %vm352, %v385
        %v395 = vld [vmem:[#allocation2] sm:$0xff]
        %v396 = vld [vmem:[#allocation2 + $0x8] sm:$0xf]
        %v399 = vcombine.high %v395, %v395
        %400 = vrot.lane.b32.xlu0 %v395, 109
        %v401 = vpop.permute.xlu0 %400
        %402 = vrot.lane.b32.xlu0 %v399, 109
        %v403 = vpop.permute.xlu0 %402
        %404 = vrot.lane.b32.xlu0 %v396, 109
        %v405 = vpop.permute.xlu0 %404
        %vm406 = vcmask 891904
        %v407 = vsel %vm406, %v401, %v403
        %v408 = vsel %vm406, %v403, %v405
        %412 = vst [vmem:[#allocation4 + $0x30] sm:$0xf] %v407
        %413 = vst [vmem:[#allocation4 + $0x38] sm:$0xf] %v408
        %414 = vst.msk [vmem:[#allocation4 + $0x40] sm:$0xf] %vm330, %v405
        %v415 = vld [vmem:[#allocation2] sm:$0xff]
        %v416 = vld [vmem:[#allocation2 + $0x8] sm:$0xf]
        %v419 = vcombine.low %v415, %v415
        %v420 = vcombine.low %v416, %v416
        %421 = vrot.lane.b32.xlu0 %v419, 108
        %v422 = vpop.permute.xlu0 %421
        %423 = vrot.lane.b32.xlu0 %v415, 108
        %v424 = vpop.permute.xlu0 %423
        %425 = vrot.lane.b32.xlu0 %v420, 108
        %v426 = vpop.permute.xlu0 %425
        %vm427 = vcmask 883712
        %v428 = vsel %vm427, %v422, %v424
        %v429 = vsel %vm427, %v424, %v426
        %433 = vst [vmem:[#allocation4 + $0x30] sm:$0xf0] %v428
        %434 = vst [vmem:[#allocation4 + $0x38] sm:$0xf0] %v429
        %435 = vst.msk [vmem:[#allocation4 + $0x40] sm:$0xf0] %vm352, %v426
        %v436 = vld [vmem:[#allocation2] sm:$0xff]
        %v437 = vld [vmem:[#allocation2 + $0x8] sm:$0xf]
        %v440 = vcombine.high %v436, %v436
        %441 = vrot.lane.b32.xlu0 %v436, 92
        %v442 = vpop.permute.xlu0 %441
        %443 = vrot.lane.b32.xlu0 %v440, 92
        %v444 = vpop.permute.xlu0 %443
        %445 = vrot.lane.b32.xlu0 %v437, 92
        %v446 = vpop.permute.xlu0 %445
        %vm447 = vcmask 752640
        %v448 = vsel %vm447, %v442, %v444
        %v449 = vsel %vm447, %v444, %v446
        %453 = vst [vmem:[#allocation4 + $0x48] sm:$0xf] %v448
        %454 = vst [vmem:[#allocation4 + $0x50] sm:$0xf] %v449
        %455 = vst.msk [vmem:[#allocation4 + $0x58] sm:$0xf] %vm330, %v446
        %v456 = vld [vmem:[#allocation2] sm:$0xff]
        %v457 = vld [vmem:[#allocation2 + $0x8] sm:$0xf]
        %v460 = vcombine.low %v456, %v456
        %v461 = vcombine.low %v457, %v457
        %462 = vrot.lane.b32.xlu0 %v460, 91
        %v463 = vpop.permute.xlu0 %462
        %464 = vrot.lane.b32.xlu0 %v456, 91
        %v465 = vpop.permute.xlu0 %464
        %466 = vrot.lane.b32.xlu0 %v461, 91
        %v467 = vpop.permute.xlu0 %466
        %vm468 = vcmask 744448
        %v469 = vsel %vm468, %v463, %v465
        %v470 = vsel %vm468, %v465, %v467
        %474 = vst [vmem:[#allocation4 + $0x48] sm:$0xf0] %v469
        %475 = vst [vmem:[#allocation4 + $0x50] sm:$0xf0] %v470
        %476 = vst.msk [vmem:[#allocation4 + $0x58] sm:$0xf0] %vm352, %v467
        %v477 = vld [vmem:[#allocation2] sm:$0xff]
        %v478 = vld [vmem:[#allocation2 + $0x8] sm:$0xf]
        %v481 = vcombine.high %v477, %v477
        %482 = vrot.lane.b32.xlu0 %v477, 90
        %v483 = vpop.permute.xlu0 %482
        %484 = vrot.lane.b32.xlu0 %v481, 90
        %v485 = vpop.permute.xlu0 %484
        %486 = vrot.lane.b32.xlu0 %v478, 90
        %v487 = vpop.permute.xlu0 %486
        %vm488 = vcmask 736256
        %v489 = vsel %vm488, %v483, %v485
        %v490 = vsel %vm488, %v485, %v487
        %494 = vst [vmem:[#allocation4 + $0x60] sm:$0xf] %v489
        %495 = vst [vmem:[#allocation4 + $0x68] sm:$0xf] %v490
        %496 = vst.msk [vmem:[#allocation4 + $0x70] sm:$0xf] %vm330, %v487
        %v497 = vld [vmem:[%s1] sm:$0xf]
        %v498 = vld [vmem:[#allocation4] sm:$0xff]
        %v499 = vld [vmem:[#allocation4 + $0x8] sm:$0xff]
        %v500 = vld [vmem:[#allocation4 + $0x10] sm:$0xff]
        %v501 = vld [vmem:[#allocation4 + $0x18] sm:$0xff]
        %v502 = vld [vmem:[#allocation4 + $0x20] sm:$0xff]
        %v503 = vld [vmem:[#allocation4 + $0x28] sm:$0xff]
        %v504 = vld [vmem:[#allocation4 + $0x30] sm:$0xff]
        %v505 = vld [vmem:[#allocation4 + $0x38] sm:$0xff]
        %v506 = vld [vmem:[#allocation4 + $0x40] sm:$0xff]
        %v507 = vld [vmem:[#allocation4 + $0x48] sm:$0xff]
        %v508 = vld [vmem:[#allocation4 + $0x50] sm:$0xff]
        %v509 = vld [vmem:[#allocation4 + $0x58] sm:$0xff]
        %v510 = vld [vmem:[#allocation4 + $0x60] sm:$0xf]
        %v511 = vld [vmem:[#allocation4 + $0x68] sm:$0xf]
        %v512 = vld [vmem:[#allocation4 + $0x70] sm:$0xf]
        %vm513 = vcmask 293888
        %v515 = vsel %vm513, %v497, 0
        %vm517 = vcmask 1043456
        %v519 = vsel %vm517, %v510, 0
        %v522 = vsel %vm517, %v511, 0
        %v525 = vsel %vm517, %v512, 0
        %527 = vmatprep.subr.mxu0 %v499
        %528 = vmatpush1.msra.mxu0 %v498
        %529 = vmatprep.subr.mxu0 %v502
        %530 = vmatpush1.msra.mxu0 %v501
        %531 = vmatprep.subr.mxu0 %v505
        %532 = vmatpush1.msra.mxu0 %v504
        %533 = vmatprep.subr.mxu0 %v508
        %534 = vmatpush1.msra.mxu0 %v507
        %535 = vmatprep.subr.mxu0 %v522
        %536 = vmatpush1.msra.mxu0 %v519
        %537 = vmatprep.subr.mxu0 0.0
        %538 = vmatpush1.msra.mxu0 0.0
        %539 = vmatprep.subr.mxu0 0.0
        %540 = vmatpush1.msra.mxu0 0.0
        %541 = vmatprep.subr.mxu0 0.0
        %542 = vmatpush1.msra.mxu0 0.0
        %543 = vmatprep.subr.mxu0 0.0
        %544 = vmatpush1.msra.mxu0 0.0
        %545 = vmatprep.subr.mxu0 0.0
        %546 = vmatpush1.msra.mxu0 0.0
        %547 = vmatprep.subr.mxu0 0.0
        %548 = vmatpush1.msra.mxu0 0.0
        %549 = vmatprep.subr.mxu0 0.0
        %550 = vmatpush1.msra.mxu0 0.0
        %551 = vmatprep.subr.mxu0 0.0
        %552 = vmatpush1.msra.mxu0 0.0
        %553 = vmatprep.subr.mxu0 0.0
        %554 = vmatpush1.msra.mxu0 0.0
        %555 = vmatprep.subr.mxu0 0.0
        %556 = vmatpush1.msra.mxu0 0.0
        %557 = vmatprep.subr.mxu0 0.0
        %558 = vmatpush1.msra.mxu0 0.0
        %559 = vmatprep.subr.mxu0 0.0
        %560 = vmatpush1.msra.mxu0 0.0
        %561 = vmatprep.subr.mxu0 0.0
        %562 = vmatpush1.msra.mxu0 0.0
        %563 = vmatprep.subr.mxu0 0.0
        %564 = vmatpush1.msra.mxu0 0.0
        %565 = vmatprep.subr.mxu0 0.0
        %566 = vmatpush1.msra.mxu0 0.0
        %567 = vmatprep.subr.mxu0 0.0
        %568 = vmatpush1.msra.mxu0 0.0
        %569 = vmatprep.subr.mxu0 0.0
        %570 = vmatpush1.msra.mxu0 0.0
        %571 = vmatprep.subr.mxu0 0.0
        %572 = vmatpush1.msra.mxu0 0.0
        %573 = vmatprep.subr.mxu0 0.0
        %574 = vmatpush1.msra.mxu0 0.0
        %575 = vmatprep.subr.mxu0 0.0
        %576 = vmatpush1.msra.mxu0 0.0
        %577 = vmatprep.subr.mxu0 0.0
        %578 = vmatpush1.msra.mxu0 0.0
        %579 = vmatprep.subr.mxu0 0.0
        %580 = vmatpush1.msra.mxu0 0.0
        %581 = vmatprep.subr.mxu0 0.0
        %582 = vmatpush1.msra.mxu0 0.0
        %583 = vmatprep.subr.mxu0 0.0
        %584 = vmatpush1.msra.mxu0 0.0
        %585 = vmatprep.subr.mxu0 0.0
        %586 = vmatpush1.msra.mxu0 0.0
        %587 = vmatprep.subr.mxu0 0.0
        %588 = vmatpush1.msra.mxu0 0.0
        %589 = vmatprep.subr.mxu0 0.0
        %590 = vmatpush1.msra.mxu0 0.0
        %591 = vmatprep.mubr.f32.mxu0 0.0
        %592 = vmatmul.mubr.f32.gmra.mrb[0].mxu0 %v515
        %v593 = vpop.f32.mrb[0].mxu0
        %v594 = vadd.f32 0.0, %v593
        %v595 = vpop.f32.mrb[0].mxu0
        %v596 = vadd.f32 0.0, %v595
        %597 = vdwg.mxu0
        %598 = vmatprep.subr.mxu0 0.0
        %599 = vmatpush1.msra.mxu0 %v500
        %600 = vmatprep.subr.mxu0 0.0
        %601 = vmatpush1.msra.mxu0 %v503
        %602 = vmatprep.subr.mxu0 0.0
        %603 = vmatpush1.msra.mxu0 %v506
        %604 = vmatprep.subr.mxu0 0.0
        %605 = vmatpush1.msra.mxu0 %v509
        %606 = vmatprep.subr.mxu0 0.0
        %607 = vmatpush1.msra.mxu0 %v525
        %608 = vmatprep.subr.mxu0 0.0
        %609 = vmatpush1.msra.mxu0 0.0
        %610 = vmatprep.subr.mxu0 0.0
        %611 = vmatpush1.msra.mxu0 0.0
        %612 = vmatprep.subr.mxu0 0.0
        %613 = vmatpush1.msra.mxu0 0.0
        %614 = vmatprep.subr.mxu0 0.0
        %615 = vmatpush1.msra.mxu0 0.0
        %616 = vmatprep.subr.mxu0 0.0
        %617 = vmatpush1.msra.mxu0 0.0
        %618 = vmatprep.subr.mxu0 0.0
        %619 = vmatpush1.msra.mxu0 0.0
        %620 = vmatprep.subr.mxu0 0.0
        %621 = vmatpush1.msra.mxu0 0.0
        %622 = vmatprep.subr.mxu0 0.0
        %623 = vmatpush1.msra.mxu0 0.0
        %624 = vmatprep.subr.mxu0 0.0
        %625 = vmatpush1.msra.mxu0 0.0
        %626 = vmatprep.subr.mxu0 0.0
        %627 = vmatpush1.msra.mxu0 0.0
        %628 = vmatprep.subr.mxu0 0.0
        %629 = vmatpush1.msra.mxu0 0.0
        %630 = vmatprep.subr.mxu0 0.0
        %631 = vmatpush1.msra.mxu0 0.0
        %632 = vmatprep.subr.mxu0 0.0
        %633 = vmatpush1.msra.mxu0 0.0
        %634 = vmatprep.subr.mxu0 0.0
        %635 = vmatpush1.msra.mxu0 0.0
        %636 = vmatprep.subr.mxu0 0.0
        %637 = vmatpush1.msra.mxu0 0.0
        %638 = vmatprep.subr.mxu0 0.0
        %639 = vmatpush1.msra.mxu0 0.0
        %640 = vmatprep.subr.mxu0 0.0
        %641 = vmatpush1.msra.mxu0 0.0
        %642 = vmatprep.subr.mxu0 0.0
        %643 = vmatpush1.msra.mxu0 0.0
        %644 = vmatprep.subr.mxu0 0.0
        %645 = vmatpush1.msra.mxu0 0.0
        %646 = vmatprep.subr.mxu0 0.0
        %647 = vmatpush1.msra.mxu0 0.0
        %648 = vmatprep.subr.mxu0 0.0
        %649 = vmatpush1.msra.mxu0 0.0
        %650 = vmatprep.subr.mxu0 0.0
        %651 = vmatpush1.msra.mxu0 0.0
        %652 = vmatprep.subr.mxu0 0.0
        %653 = vmatpush1.msra.mxu0 0.0
        %654 = vmatprep.subr.mxu0 0.0
        %655 = vmatpush1.msra.mxu0 0.0
        %656 = vmatprep.subr.mxu0 0.0
        %657 = vmatpush1.msra.mxu0 0.0
        %658 = vmatprep.subr.mxu0 0.0
        %659 = vmatpush1.msra.mxu0 0.0
        %660 = vmatprep.subr.mxu0 0.0
        %661 = vmatpush1.msra.mxu0 0.0
        %662 = vmatprep.mubr.f32.mxu0 0.0
        %663 = vmatmul.mubr.f32.gmra.mrb[0].mxu0 %v515
        %v664 = vpop.f32.mrb[0].mxu0
        %v665 = vadd.f32 0.0, %v664
        %v666 = vpop.f32.mrb[0].mxu0
        %667 = vdwg.mxu0
        %v668 = vld [vmem:[%s3] sm:$0xf]
        %670 = vset.pattern.permute.xlu0 0
        %671 = vperm.xlu0 %670, %v668
        %v672 = vpop.permute.xlu0 %671
        %v674 = vmul.f32 %v594, %v672
        %v675 = vmul.f32 %v596, %v672
        %v676 = vmul.f32 %v665, %v672
        %v677 = vld [vmem:[%s4] sm:$0xf]
        %679 = vset.pattern.permute.xlu0 0
        %680 = vperm.xlu0 %679, %v677
        %v681 = vpop.permute.xlu0 %680
        %v683 = vadd.f32 %v674, %v681
        %v684 = vadd.f32 %v675, %v681
        %v685 = vadd.f32 %v676, %v681
        %v686 = vmax.f32 %v683, 0.0
        %v687 = vmax.f32 %v684, 0.0
        %v688 = vmax.f32 %v685, 0.0
        %v689 = vlaneseq
        %v690 = vand.u32 %v689, 127
        %v691 = vadd.s32 %v690, 128
        %v692 = vadd.s32 %v690, 256
        %vm693 = vcmp.lt.s32.totalorder %v690, 0
        %v694 = vsub.s32 0, %v690
        %v695 = vsel %vm693, %v694, %v690
        %v696 = vmul.u32.u64.compose %v695, 3817748708
        %v697 = vextract.low.u32 %v696
        %v698 = vextract.high.u32 %v696
        %v699 = vshrl.u32 %v698, 4
        %v700 = vmul.u32 %v699, 18
        %v701 = vsub.s32 %v695, %v700
        %v702 = vsub.s32 0, %v701
        %v703 = vsel %vm693, %v702, %v701
        %vm704 = vcmp.lt.s32.totalorder %v691, 0
        %v705 = vsub.s32 0, %v691
        %v706 = vsel %vm704, %v705, %v691
        %v707 = vmul.u32.u64.compose %v706, 3817748708
        %v708 = vextract.low.u32 %v707
        %v709 = vextract.high.u32 %v707
        %v710 = vshrl.u32 %v709, 4
        %v711 = vmul.u32 %v710, 18
        %v712 = vsub.s32 %v706, %v711
        %v713 = vsub.s32 0, %v712
        %v714 = vsel %vm704, %v713, %v712
        %vm715 = vcmp.lt.s32.totalorder %v692, 0
        %v716 = vsub.s32 0, %v692
        %v717 = vsel %vm715, %v716, %v692
        %v718 = vmul.u32.u64.compose %v717, 3817748708
        %v719 = vextract.low.u32 %v718
        %v720 = vextract.high.u32 %v718
        %v721 = vshrl.u32 %v720, 4
        %v722 = vmul.u32 %v721, 18
        %v723 = vsub.s32 %v717, %v722
        %v724 = vsub.s32 0, %v723
        %v725 = vsel %vm715, %v724, %v723
        %vm726 = vcmp.ne.s32.totalorder %v703, 0
        %vm727 = vcmp.ne.s32.totalorder %v714, 0
        %vm728 = vcmp.ne.s32.totalorder %v725, 0
        %vm729 = vcmp.lt.s32.totalorder %v703, 0
        %vm730 = vcmp.lt.s32.totalorder %v714, 0
        %vm731 = vcmp.lt.s32.totalorder %v725, 0
        %vm732 = vmand %vm729, %vm726
        %vm733 = vmand %vm730, %vm727
        %vm734 = vmand %vm731, %vm728
        %v735 = vadd.s32 %v703, 18
        %v736 = vadd.s32 %v714, 18
        %v737 = vadd.s32 %v725, 18
        %v738 = vsel %vm732, %v735, %v703
        %v739 = vsel %vm733, %v736, %v714
        %v740 = vsel %vm734, %v737, %v725
        %vm741 = vcmp.lt.s32.totalorder %v738, 16
        %vm742 = vcmp.lt.s32.totalorder %v739, 16
        %vm743 = vcmp.lt.s32.totalorder %v740, 16
        %v744 = vsel %vm741, 1, 0
        %v745 = vsel %vm742, 1, 0
        %v746 = vsel %vm743, 1, 0
        %vm747 = vcmp.eq.s32.totalorder %v744, 1
        %vm748 = vcmp.eq.s32.totalorder %v745, 1
        %vm749 = vcmp.eq.s32.totalorder %v746, 1
        %v750 = vsel %vm747, %v686, 0.0
        %v751 = vsel %vm748, %v687, 0.0
        %v752 = vsel %vm749, %v688, 0.0
        %v756 = vcombine.low %v750, %v751
        %757 = vrot.lane.b32.xlu0 %v756, 19
        %v758 = vpop.permute.xlu0 %757
        %759 = vrot.lane.b32.xlu0 %v752, 19
        %v760 = vpop.permute.xlu0 %759
        %v761 = vrot.slane %v758, 4
        %v762 = vsel %vm312, %v761, %v758
        %v763 = vsel %vm312, %v761, %v760
        %766 = vst.msk [vmem:[#allocation3] sm:$0xff] %vm319, %v762
        %767 = vst.msk [vmem:[#allocation3 + $0x8] sm:$0xf] %vm321, %v763
        %v768 = vld [vmem:[#allocation3] sm:$0xff]
        %v769 = vld [vmem:[#allocation3 + $0x8] sm:$0xf]
        %v771 = vcombine.high %v768, %v768
        %773 = vst [vmem:[#allocation4] sm:$0xf] %v768
        %774 = vst [vmem:[#allocation4 + $0x8] sm:$0xf] %v771
        %775 = vst.msk [vmem:[#allocation4 + $0x10] sm:$0xf] %vm330, %v769
        %v776 = vld [vmem:[#allocation3] sm:$0xff]
        %v777 = vld [vmem:[#allocation3 + $0x8] sm:$0xf]
        %v780 = vcombine.low %v776, %v776
        %v781 = vcombine.low %v777, %v777
        %782 = vrot.lane.b32.xlu0 %v780, 127
        %v783 = vpop.permute.xlu0 %782
        %784 = vrot.lane.b32.xlu0 %v776, 127
        %v785 = vpop.permute.xlu0 %784
        %786 = vrot.lane.b32.xlu0 %v781, 127
        %v787 = vpop.permute.xlu0 %786
        %v788 = vsel %vm344, %v783, %v785
        %v789 = vsel %vm344, %v785, %v787
        %793 = vst [vmem:[#allocation4] sm:$0xf0] %v788
        %794 = vst [vmem:[#allocation4 + $0x8] sm:$0xf0] %v789
        %795 = vst.msk [vmem:[#allocation4 + $0x10] sm:$0xf0] %vm352, %v787
        %v796 = vld [vmem:[#allocation3] sm:$0xff]
        %v797 = vld [vmem:[#allocation3 + $0x8] sm:$0xf]
        %v800 = vcombine.high %v796, %v796
        %801 = vrot.lane.b32.xlu0 %v796, 126
        %v802 = vpop.permute.xlu0 %801
        %803 = vrot.lane.b32.xlu0 %v800, 126
        %v804 = vpop.permute.xlu0 %803
        %805 = vrot.lane.b32.xlu0 %v797, 126
        %v806 = vpop.permute.xlu0 %805
        %v807 = vsel %vm365, %v802, %v804
        %v808 = vsel %vm365, %v804, %v806
        %812 = vst [vmem:[#allocation4 + $0x18] sm:$0xf] %v807
        %813 = vst [vmem:[#allocation4 + $0x20] sm:$0xf] %v808
        %814 = vst.msk [vmem:[#allocation4 + $0x28] sm:$0xf] %vm330, %v806
        %v815 = vld [vmem:[#allocation3] sm:$0xff]
        %v816 = vld [vmem:[#allocation3 + $0x8] sm:$0xf]
        %v819 = vcombine.low %v815, %v815
        %v820 = vcombine.low %v816, %v816
        %821 = vrot.lane.b32.xlu0 %v819, 110
        %v822 = vpop.permute.xlu0 %821
        %823 = vrot.lane.b32.xlu0 %v815, 110
        %v824 = vpop.permute.xlu0 %823
        %825 = vrot.lane.b32.xlu0 %v820, 110
        %v826 = vpop.permute.xlu0 %825
        %v827 = vsel %vm386, %v822, %v824
        %v828 = vsel %vm386, %v824, %v826
        %832 = vst [vmem:[#allocation4 + $0x18] sm:$0xf0] %v827
        %833 = vst [vmem:[#allocation4 + $0x20] sm:$0xf0] %v828
        %834 = vst.msk [vmem:[#allocation4 + $0x28] sm:$0xf0] %vm352, %v826
        %v835 = vld [vmem:[#allocation3] sm:$0xff]
        %v836 = vld [vmem:[#allocation3 + $0x8] sm:$0xf]
        %v839 = vcombine.high %v835, %v835
        %840 = vrot.lane.b32.xlu0 %v835, 109
        %v841 = vpop.permute.xlu0 %840
        %842 = vrot.lane.b32.xlu0 %v839, 109
        %v843 = vpop.permute.xlu0 %842
        %844 = vrot.lane.b32.xlu0 %v836, 109
        %v845 = vpop.permute.xlu0 %844
        %v846 = vsel %vm406, %v841, %v843
        %v847 = vsel %vm406, %v843, %v845
        %851 = vst [vmem:[#allocation4 + $0x30] sm:$0xf] %v846
        %852 = vst [vmem:[#allocation4 + $0x38] sm:$0xf] %v847
        %853 = vst.msk [vmem:[#allocation4 + $0x40] sm:$0xf] %vm330, %v845
        %v854 = vld [vmem:[#allocation3] sm:$0xff]
        %v855 = vld [vmem:[#allocation3 + $0x8] sm:$0xf]
        %v858 = vcombine.low %v854, %v854
        %v859 = vcombine.low %v855, %v855
        %860 = vrot.lane.b32.xlu0 %v858, 108
        %v861 = vpop.permute.xlu0 %860
        %862 = vrot.lane.b32.xlu0 %v854, 108
        %v863 = vpop.permute.xlu0 %862
        %864 = vrot.lane.b32.xlu0 %v859, 108
        %v865 = vpop.permute.xlu0 %864
        %v866 = vsel %vm427, %v861, %v863
        %v867 = vsel %vm427, %v863, %v865
        %871 = vst [vmem:[#allocation4 + $0x30] sm:$0xf0] %v866
        %872 = vst [vmem:[#allocation4 + $0x38] sm:$0xf0] %v867
        %873 = vst.msk [vmem:[#allocation4 + $0x40] sm:$0xf0] %vm352, %v865
        %v874 = vld [vmem:[#allocation3] sm:$0xff]
        %v875 = vld [vmem:[#allocation3 + $0x8] sm:$0xf]
        %v878 = vcombine.high %v874, %v874
        %879 = vrot.lane.b32.xlu0 %v874, 92
        %v880 = vpop.permute.xlu0 %879
        %881 = vrot.lane.b32.xlu0 %v878, 92
        %v882 = vpop.permute.xlu0 %881
        %883 = vrot.lane.b32.xlu0 %v875, 92
        %v884 = vpop.permute.xlu0 %883
        %v885 = vsel %vm447, %v880, %v882
        %v886 = vsel %vm447, %v882, %v884
        %890 = vst [vmem:[#allocation4 + $0x48] sm:$0xf] %v885
        %891 = vst [vmem:[#allocation4 + $0x50] sm:$0xf] %v886
        %892 = vst.msk [vmem:[#allocation4 + $0x58] sm:$0xf] %vm330, %v884
        %v893 = vld [vmem:[#allocation3] sm:$0xff]
        %v894 = vld [vmem:[#allocation3 + $0x8] sm:$0xf]
        %v897 = vcombine.low %v893, %v893
        %v898 = vcombine.low %v894, %v894
        %899 = vrot.lane.b32.xlu0 %v897, 91
        %v900 = vpop.permute.xlu0 %899
        %901 = vrot.lane.b32.xlu0 %v893, 91
        %v902 = vpop.permute.xlu0 %901
        %903 = vrot.lane.b32.xlu0 %v898, 91
        %v904 = vpop.permute.xlu0 %903
        %v905 = vsel %vm468, %v900, %v902
        %v906 = vsel %vm468, %v902, %v904
        %910 = vst [vmem:[#allocation4 + $0x48] sm:$0xf0] %v905
        %911 = vst [vmem:[#allocation4 + $0x50] sm:$0xf0] %v906
        %912 = vst.msk [vmem:[#allocation4 + $0x58] sm:$0xf0] %vm352, %v904
        %v913 = vld [vmem:[#allocation3] sm:$0xff]
        %v914 = vld [vmem:[#allocation3 + $0x8] sm:$0xf]
        %v917 = vcombine.high %v913, %v913
        %918 = vrot.lane.b32.xlu0 %v913, 90
        %v919 = vpop.permute.xlu0 %918
        %920 = vrot.lane.b32.xlu0 %v917, 90
        %v921 = vpop.permute.xlu0 %920
        %922 = vrot.lane.b32.xlu0 %v914, 90
        %v923 = vpop.permute.xlu0 %922
        %v924 = vsel %vm488, %v919, %v921
        %v925 = vsel %vm488, %v921, %v923
        %929 = vst [vmem:[#allocation4 + $0x60] sm:$0xf] %v924
        %930 = vst [vmem:[#allocation4 + $0x68] sm:$0xf] %v925
        %931 = vst.msk [vmem:[#allocation4 + $0x70] sm:$0xf] %vm330, %v923
        %v932 = vld [vmem:[%s2] sm:$0xf]
        %v933 = vld [vmem:[#allocation4] sm:$0xff]
        %v934 = vld [vmem:[#allocation4 + $0x8] sm:$0xff]
        %v935 = vld [vmem:[#allocation4 + $0x10] sm:$0xff]
        %v936 = vld [vmem:[#allocation4 + $0x18] sm:$0xff]
        %v937 = vld [vmem:[#allocation4 + $0x20] sm:$0xff]
        %v938 = vld [vmem:[#allocation4 + $0x28] sm:$0xff]
        %v939 = vld [vmem:[#allocation4 + $0x30] sm:$0xff]
        %v940 = vld [vmem:[#allocation4 + $0x38] sm:$0xff]
        %v941 = vld [vmem:[#allocation4 + $0x40] sm:$0xff]
        %v942 = vld [vmem:[#allocation4 + $0x48] sm:$0xff]
        %v943 = vld [vmem:[#allocation4 + $0x50] sm:$0xff]
        %v944 = vld [vmem:[#allocation4 + $0x58] sm:$0xff]
        %v945 = vld [vmem:[#allocation4 + $0x60] sm:$0xf]
        %v946 = vld [vmem:[#allocation4 + $0x68] sm:$0xf]
        %v947 = vld [vmem:[#allocation4 + $0x70] sm:$0xf]
        %v949 = vsel %vm513, %v932, 0
        %v952 = vsel %vm517, %v945, 0
        %v955 = vsel %vm517, %v946, 0
        %v958 = vsel %vm517, %v947, 0
        %960 = vmatprep.subr.mxu0 %v934
        %961 = vmatpush1.msra.mxu0 %v933
        %962 = vmatprep.subr.mxu0 %v937
        %963 = vmatpush1.msra.mxu0 %v936
        %964 = vmatprep.subr.mxu0 %v940
        %965 = vmatpush1.msra.mxu0 %v939
        %966 = vmatprep.subr.mxu0 %v943
        %967 = vmatpush1.msra.mxu0 %v942
        %968 = vmatprep.subr.mxu0 %v955
        %969 = vmatpush1.msra.mxu0 %v952
        %970 = vmatprep.subr.mxu0 0.0
        %971 = vmatpush1.msra.mxu0 0.0
        %972 = vmatprep.subr.mxu0 0.0
        %973 = vmatpush1.msra.mxu0 0.0
        %974 = vmatprep.subr.mxu0 0.0
        %975 = vmatpush1.msra.mxu0 0.0
        %976 = vmatprep.subr.mxu0 0.0
        %977 = vmatpush1.msra.mxu0 0.0
        %978 = vmatprep.subr.mxu0 0.0
        %979 = vmatpush1.msra.mxu0 0.0
        %980 = vmatprep.subr.mxu0 0.0
        %981 = vmatpush1.msra.mxu0 0.0
        %982 = vmatprep.subr.mxu0 0.0
        %983 = vmatpush1.msra.mxu0 0.0
        %984 = vmatprep.subr.mxu0 0.0
        %985 = vmatpush1.msra.mxu0 0.0
        %986 = vmatprep.subr.mxu0 0.0
        %987 = vmatpush1.msra.mxu0 0.0
        %988 = vmatprep.subr.mxu0 0.0
        %989 = vmatpush1.msra.mxu0 0.0
        %990 = vmatprep.subr.mxu0 0.0
        %991 = vmatpush1.msra.mxu0 0.0
        %992 = vmatprep.subr.mxu0 0.0
        %993 = vmatpush1.msra.mxu0 0.0
        %994 = vmatprep.subr.mxu0 0.0
        %995 = vmatpush1.msra.mxu0 0.0
        %996 = vmatprep.subr.mxu0 0.0
        %997 = vmatpush1.msra.mxu0 0.0
        %998 = vmatprep.subr.mxu0 0.0
        %999 = vmatpush1.msra.mxu0 0.0
        %1000 = vmatprep.subr.mxu0 0.0
        %1001 = vmatpush1.msra.mxu0 0.0
        %1002 = vmatprep.subr.mxu0 0.0
        %1003 = vmatpush1.msra.mxu0 0.0
        %1004 = vmatprep.subr.mxu0 0.0
        %1005 = vmatpush1.msra.mxu0 0.0
        %1006 = vmatprep.subr.mxu0 0.0
        %1007 = vmatpush1.msra.mxu0 0.0
        %1008 = vmatprep.subr.mxu0 0.0
        %1009 = vmatpush1.msra.mxu0 0.0
        %1010 = vmatprep.subr.mxu0 0.0
        %1011 = vmatpush1.msra.mxu0 0.0
        %1012 = vmatprep.subr.mxu0 0.0
        %1013 = vmatpush1.msra.mxu0 0.0
        %1014 = vmatprep.subr.mxu0 0.0
        %1015 = vmatpush1.msra.mxu0 0.0
        %1016 = vmatprep.subr.mxu0 0.0
        %1017 = vmatpush1.msra.mxu0 0.0
        %1018 = vmatprep.subr.mxu0 0.0
        %1019 = vmatpush1.msra.mxu0 0.0
        %1020 = vmatprep.subr.mxu0 0.0
        %1021 = vmatpush1.msra.mxu0 0.0
        %1022 = vmatprep.subr.mxu0 0.0
        %1023 = vmatpush1.msra.mxu0 0.0
        %1024 = vmatprep.mubr.f32.mxu0 0.0
        %1025 = vmatmul.mubr.f32.gmra.mrb[0].mxu0 %v949
        %v1026 = vpop.f32.mrb[0].mxu0
        %v1027 = vadd.f32 0.0, %v1026
        %v1028 = vpop.f32.mrb[0].mxu0
        %v1029 = vadd.f32 0.0, %v1028
        %1030 = vdwg.mxu0
        %1031 = vmatprep.subr.mxu0 0.0
        %1032 = vmatpush1.msra.mxu0 %v935
        %1033 = vmatprep.subr.mxu0 0.0
        %1034 = vmatpush1.msra.mxu0 %v938
        %1035 = vmatprep.subr.mxu0 0.0
        %1036 = vmatpush1.msra.mxu0 %v941
        %1037 = vmatprep.subr.mxu0 0.0
        %1038 = vmatpush1.msra.mxu0 %v944
        %1039 = vmatprep.subr.mxu0 0.0
        %1040 = vmatpush1.msra.mxu0 %v958
        %1041 = vmatprep.subr.mxu0 0.0
        %1042 = vmatpush1.msra.mxu0 0.0
        %1043 = vmatprep.subr.mxu0 0.0
        %1044 = vmatpush1.msra.mxu0 0.0
        %1045 = vmatprep.subr.mxu0 0.0
        %1046 = vmatpush1.msra.mxu0 0.0
        %1047 = vmatprep.subr.mxu0 0.0
        %1048 = vmatpush1.msra.mxu0 0.0
        %1049 = vmatprep.subr.mxu0 0.0
        %1050 = vmatpush1.msra.mxu0 0.0
        %1051 = vmatprep.subr.mxu0 0.0
        %1052 = vmatpush1.msra.mxu0 0.0
        %1053 = vmatprep.subr.mxu0 0.0
        %1054 = vmatpush1.msra.mxu0 0.0
        %1055 = vmatprep.subr.mxu0 0.0
        %1056 = vmatpush1.msra.mxu0 0.0
        %1057 = vmatprep.subr.mxu0 0.0
        %1058 = vmatpush1.msra.mxu0 0.0
        %1059 = vmatprep.subr.mxu0 0.0
        %1060 = vmatpush1.msra.mxu0 0.0
        %1061 = vmatprep.subr.mxu0 0.0
        %1062 = vmatpush1.msra.mxu0 0.0
        %1063 = vmatprep.subr.mxu0 0.0
        %1064 = vmatpush1.msra.mxu0 0.0
        %1065 = vmatprep.subr.mxu0 0.0
        %1066 = vmatpush1.msra.mxu0 0.0
        %1067 = vmatprep.subr.mxu0 0.0
        %1068 = vmatpush1.msra.mxu0 0.0
        %1069 = vmatprep.subr.mxu0 0.0
        %1070 = vmatpush1.msra.mxu0 0.0
        %1071 = vmatprep.subr.mxu0 0.0
        %1072 = vmatpush1.msra.mxu0 0.0
        %1073 = vmatprep.subr.mxu0 0.0
        %1074 = vmatpush1.msra.mxu0 0.0
        %1075 = vmatprep.subr.mxu0 0.0
        %1076 = vmatpush1.msra.mxu0 0.0
        %1077 = vmatprep.subr.mxu0 0.0
        %1078 = vmatpush1.msra.mxu0 0.0
        %1079 = vmatprep.subr.mxu0 0.0
        %1080 = vmatpush1.msra.mxu0 0.0
        %1081 = vmatprep.subr.mxu0 0.0
        %1082 = vmatpush1.msra.mxu0 0.0
        %1083 = vmatprep.subr.mxu0 0.0
        %1084 = vmatpush1.msra.mxu0 0.0
        %1085 = vmatprep.subr.mxu0 0.0
        %1086 = vmatpush1.msra.mxu0 0.0
        %1087 = vmatprep.subr.mxu0 0.0
        %1088 = vmatpush1.msra.mxu0 0.0
        %1089 = vmatprep.subr.mxu0 0.0
        %1090 = vmatpush1.msra.mxu0 0.0
        %1091 = vmatprep.subr.mxu0 0.0
        %1092 = vmatpush1.msra.mxu0 0.0
        %1093 = vmatprep.subr.mxu0 0.0
        %1094 = vmatpush1.msra.mxu0 0.0
        %1095 = vmatprep.mubr.f32.mxu0 0.0
        %1096 = vmatmul.mubr.f32.gmra.mrb[0].mxu0 %v949
        %v1097 = vpop.f32.mrb[0].mxu0
        %v1098 = vadd.f32 0.0, %v1097
        %v1099 = vpop.f32.mrb[0].mxu0
        %1100 = vdwg.mxu0
        %v1101 = vld [vmem:[%s5] sm:$0xf]
        %1103 = vset.pattern.permute.xlu0 0
        %1104 = vperm.xlu0 %1103, %v1101
        %v1105 = vpop.permute.xlu0 %1104
        %v1107 = vmul.f32 %v1027, %v1105
        %v1108 = vmul.f32 %v1029, %v1105
        %v1109 = vmul.f32 %v1098, %v1105
        %v1110 = vld [vmem:[%s6] sm:$0xf]
        %1112 = vset.pattern.permute.xlu0 0
        %1113 = vperm.xlu0 %1112, %v1110
        %v1114 = vpop.permute.xlu0 %1113
        %v1116 = vadd.f32 %v1107, %v1114
        %v1117 = vadd.f32 %v1108, %v1114
        %v1118 = vadd.f32 %v1109, %v1114
        %v1119 = vld [vmem:[#allocation2] sm:$0xff]
        %v1120 = vld [vmem:[#allocation2 + $0x8] sm:$0xf]
        %v1123 = vcombine.high %v1119, %v1119
        %1124 = vrot.lane.b32.xlu0 %v1119, 109
        %v1125 = vpop.permute.xlu0 %1124
        %1126 = vrot.lane.b32.xlu0 %v1123, 109
        %v1127 = vpop.permute.xlu0 %1126
        %1128 = vrot.lane.b32.xlu0 %v1120, 109
        %v1129 = vpop.permute.xlu0 %1128
        %v1130 = vsel %vm406, %v1125, %v1127
        %v1131 = vsel %vm406, %v1127, %v1129
        %v1135 = vadd.f32 %v1116, %v1130
        %v1136 = vadd.f32 %v1117, %v1131
        %v1137 = vadd.f32 %v1118, %v1129
        %v1140 = vcombine.low %v1135, %v1136
        %1142 = vst [vmem:[%s294] sm:$0xff] %v1140
        %1143 = vst.msk [vmem:[%s294 + $0x8] sm:$0xf] %vm330, %v1137
        %s1144 = sand.u32 %s184, 1
        %s1145 = scalar_lea.sflag [#allocation7], %s1144
        %s1146 = sand.u32 %s184, 1
        %s1147 = smul.addr %s1146, 12
        %s1148 = scalar_lea.vmem [#allocation8], %s1147
        // Predicated region
        $region53: #{tpu_custom_call.1} parent=47 // pred_check
          %p1149 = pneg %p194
        $region54: #{tpu_custom_call.1} parent=47 // pred_check_branch
          %1151 = sbr.rel (%p1149) target = $region56
        $region55: #{tpu_custom_call.1} parent=47 // pred_region
          %s1153 = ssub.s32 192, 192
          %1154 = vsyncadd %s1145, %s1153
          %s1155 = smul.addr %s24, 3
          %s1156 = smul.addr %s1155, 64
          %s1157 = scalar_lea.hbm %s7, %s1156
          %s1159 = sshll.u32 %s1148, 4
          %s1160 = int_to_ptr.vmem [resolvable:$true] %s1159
          %1162 = dma.vmem_to_hbm [thread:$0]  %s1160, 192, %s1157, %s1145
        $region56: #{tpu_custom_call.1} parent=47 // pred_fallthru
          _
      $region48: #{tpu_custom_call.1} parent=5 // pred_fallthru
        _
      %p1163 = scmp.le.s32.totalorder 2, %s19
      // Predicated region
      $region57: #{tpu_custom_call.1} parent=5 // pred_check
        %p1164 = pneg %p1163
      $region58: #{tpu_custom_call.1} parent=5 // pred_check_branch
        %1166 = sbr.rel (%p1164) target = $region60
      $region59: #{tpu_custom_call.1} parent=5 // pred_region
        %s1167 = ssub.s32 %s19, 2
        // Predicated region
        $region61: #{tpu_custom_call.1} parent=59 // pred_check
          %p1168 = pneg %p200
        $region62: #{tpu_custom_call.1} parent=59 // pred_check_branch
          %1170 = sbr.rel (%p1168) target = $region64
        $region63: #{tpu_custom_call.1} parent=59 // pred_region
          %s1171 = sand.u32 %s185, 1
          %s1172 = scalar_lea.sflag [#allocation7], %s1171
          %s1173 = sand.u32 %s185, 1
          %s1174 = smul.addr %s1173, 12
          %s1175 = scalar_lea.vmem [#allocation8], %s1174
          %1176 = dma.done %s1172, 192
        $region64: #{tpu_custom_call.1} parent=59 // pred_fallthru
          _
      $region60: #{tpu_custom_call.1} parent=5 // pred_fallthru
        _
    $region6: #{tpu_custom_call.1} parent=1 // loop_footer
      %s23 = sadd.s32 1, %s19
    $region7: #{tpu_custom_call.1} parent=1 // loop_footer_branch
      %18 = sbr.rel target = $region3
    $region8: #{tpu_custom_call.1} parent=1 // loop_exit
      _
    %1177 = vsyncpa [#allocation6], 1
    %s1178 = scalar_lea.sflag [#allocation6], 1
    %1179 = vsyncpa %s1178, 1
    %1180 = vsyncpa [#allocation7], 1
    %s1181 = scalar_lea.sflag [#allocation7], 1
    %1182 = vsyncpa %s1181, 1

</llo_original>
